<compile_context>
chip_gen: v5e
topology: v5e:2x2
jax: 0.10.0
libtpu: 0.0.40
codegen_flags: <defaults>
</compile_context>

<pallas_src>
import jax
import jax.numpy as jnp
from jax.experimental import pallas as pl
from jax.experimental.pallas import tpu as pltpu

_VMEM_LIMIT = 48 * 1024 * 1024   # explicit cap; fits v7x's 64 MiB physical VMEM


# ---------------------------------------------------------------------------
# Kernel 1: fused 1x1 convs + LeakyReLU + residual, spatial-on-lanes layout
# ---------------------------------------------------------------------------
def _conv_kernel(x_ref, w1_ref, b1_ref, w2_ref, b2_ref, o_ref):
    x = x_ref[0].astype(jnp.float32)                       # (C, tS), spatial on lanes
    h1 = jnp.dot(w1_ref[...], x, preferred_element_type=jnp.float32) + b1_ref[...]
    h1 = jnp.where(h1 > 0, h1, 0.2 * h1)                   # LeakyReLU(0.2)
    h2 = jnp.dot(w2_ref[...], h1, preferred_element_type=jnp.float32) + b2_ref[...]
    h2 = jnp.where(h2 > 0, h2, 0.2 * h2)                   # LeakyReLU(0.2)
    c = x.shape[0]
    # residual repeat(1,4,1,1): out[k*C + i] += x[i]  -> 4 slice-adds, no concat temp
    for k in range(4):
        o_ref[0, k * c:(k + 1) * c, :] = (h2[k * c:(k + 1) * c, :] + x).astype(o_ref.dtype)


def _spatial_tile(hw):
    # Big lane-dense tiles amortize the ~0.35us/step overhead; a 2048-wide f32 tile is
    # only (C + 4C) * 2048 * 4 B per step -> far below VMEM even double-buffered.
    return hw if hw <= 2048 else 2048


def fused_1x1_convs(x, w1, b1, w2, b2):
    B, C, H, W = x.shape
    hw = H * W
    ts = _spatial_tile(hw)
    x3 = x.reshape(B, C, hw)                               # free reshape of NCHW
    return pl.pallas_call(
        _conv_kernel,
        out_shape=jax.ShapeDtypeStruct((B, 4 * C, hw), x.dtype),
        grid=(B, pl.cdiv(hw, ts)),                         # ragged tail -> masked edge block
        in_specs=[
            pl.BlockSpec((1, C, ts), lambda b, s: (b, 0, s)),
            pl.BlockSpec((2 * C, C), lambda b, s: (0, 0)),
            pl.BlockSpec((2 * C, 1), lambda b, s: (0, 0)),
            pl.BlockSpec((4 * C, 2 * C), lambda b, s: (0, 0)),
            pl.BlockSpec((4 * C, 1), lambda b, s: (0, 0)),
        ],
        out_specs=pl.BlockSpec((1, 4 * C, ts), lambda b, s: (b, 0, s)),
        compiler_params=pltpu.CompilerParams(
            dimension_semantics=("parallel", "parallel"),
            vmem_limit_bytes=_VMEM_LIMIT),
    )(x3, w1, b1, w2, b2)


# ---------------------------------------------------------------------------
# Kernel 2: fused pixel_shuffle(2) + reflect pad + separable 3x3 blur
# ---------------------------------------------------------------------------
def _shuffle_blur_kernel(h_ref, p_ref, o_ref):
    hb = h_ref[0].astype(jnp.float32)        # (Cb, 4, H, W); phase index p = 2*i + j
    p00, p01, p10, p11 = hb[:, 0], hb[:, 1], hb[:, 2], hb[:, 3]

    # reflect-by-1 padding on the 2x grid == edge-clamp by 1 on the phase planes
    def up(a):     # a[h-1], clamped at h=0
        return jnp.concatenate([a[:, :1, :], a[:, :-1, :]], axis=1)

    def down(a):   # a[h+1], clamped at h=H-1
        return jnp.concatenate([a[:, 1:, :], a[:, -1:, :]], axis=1)

    def left(a):   # a[w-1], clamped at w=0
        return jnp.concatenate([a[:, :, :1], a[:, :, :-1]], axis=2)

    def right(a):  # a[w+1], clamped at w=W-1
        return jnp.concatenate([a[:, :, 1:], a[:, :, -1:]], axis=2)

    # separable blur: vertical [1,2,1]/4 ...
    v00 = (up(p10) + 2.0 * p00 + p10) * 0.25   # output row-phase 0, col-phase 0
    v01 = (up(p11) + 2.0 * p01 + p11) * 0.25   # output row-phase 0, col-phase 1
    v10 = (p00 + 2.0 * p10 + down(p00)) * 0.25 # output row-phase 1, col-phase 0
    v11 = (p01 + 2.0 * p11 + down(p01)) * 0.25 # output row-phase 1, col-phase 1
    # ... then horizontal [1,2,1]/4
    o00 = (left(v01) + 2.0 * v00 + v01) * 0.25
    o01 = (v00 + 2.0 * v01 + right(v00)) * 0.25
    o10 = (left(v11) + 2.0 * v10 + v11) * 0.25
    o11 = (v10 + 2.0 * v11 + right(v10)) * 0.25

    # Interleave the 4 output phases into the final NCHW row-pair layout with an exact
    # one-hot permutation matmul -> one dense (Cb, H, 4W) lane-major store.
    cb, hh, ww = o00.shape
    y = jnp.concatenate([o00, o01, o10, o11], axis=2)       # (Cb, H, 4W)
    y2 = y.reshape(cb * hh, 4 * ww)
    out = jnp.dot(y2, p_ref[...], preferred_element_type=jnp.float32)
    o_ref[0] = out.reshape(cb, hh, 4 * ww).astype(o_ref.dtype)


def _interleave_perm(W, dtype=jnp.float32):
    # P[k, m] = 1 iff final column m of the (row-pair, 4W) layout comes from column k of
    # concat([o00, o01, o10, o11], -1).  Row pair h holds row 2h (cols 0..2W-1) then row
    # 2h+1 (cols 2W..4W-1); within a row, even/odd columns alternate col-phase 0/1.
    m = jnp.arange(4 * W)
    row_phase = m // (2 * W)
    mm = m % (2 * W)
    col_phase = mm % 2
    w = mm // 2
    src = (2 * row_phase + col_phase) * W + w
    return (jnp.arange(4 * W)[:, None] == src[None, :]).astype(dtype)


def _channel_block(C, H, W, budget_bytes=8 * 1024 * 1024):
    # Largest divisor of C whose (input + output) f32 blocks, double-buffered, fit budget.
    per_chan = (4 * H * W + H * 4 * W) * 4 * 2
    cb = 1
    for d in range(1, C + 1):
        if C % d == 0 and d * per_chan <= budget_bytes:
            cb = d
    return cb


def shuffle_blur(conv_out, B, C, H, W):
    # NOTE: for very small W (demo W=16) the blur math is lane-sparse; with production
    # W >= 32 the 4W-wide output store is fully lane-dense.  The blur is a tiny fraction
    # of total work either way.
    h5 = conv_out.reshape(B, C, 4, H, W)            # channel 4c+p -> (c, p); free reshape
    perm = _interleave_perm(W)
    cb = _channel_block(C, H, W)
    out4 = pl.pallas_call(
        _shuffle_blur_kernel,
        out_shape=jax.ShapeDtypeStruct((B, C, H, 4 * W), conv_out.dtype),
        grid=(B, C // cb),
        in_specs=[
            pl.BlockSpec((1, cb, 4, H, W), lambda b, c: (b, c, 0, 0, 0)),
            pl.BlockSpec((4 * W, 4 * W), lambda b, c: (0, 0)),
        ],
        out_specs=pl.BlockSpec((1, cb, H, 4 * W), lambda b, c: (b, c, 0, 0)),
        compiler_params=pltpu.CompilerParams(
            dimension_semantics=("parallel", "parallel"),
            vmem_limit_bytes=_VMEM_LIMIT),
    )(h5, perm)
    # [B, C, H, 4W] row-pair layout reshapes for free (row-major) to [B, C, 2H, 2W]
    return out4.reshape(B, C, 2 * H, 2 * W)


# ---------------------------------------------------------------------------
# Full forward
# ---------------------------------------------------------------------------
def pixel_shuffle_upsample(x, params):
    B, C, H, W = x.shape
    conv_out = fused_1x1_convs(x, params["w1"], params["b1"], params["w2"], params["b2"])
    return shuffle_blur(conv_out, B, C, H, W)


# ---------------------------------------------------------------------------
# Pure-JAX reference (independent path for a correctness sanity check)
# ---------------------------------------------------------------------------
def reference_forward(x, params):
    B, C, H, W = x.shape
    w1, b1 = params["w1"], params["b1"].reshape(-1)
    w2, b2 = params["w2"], params["b2"].reshape(-1)

    def leaky(v):
        return jnp.where(v > 0, v, 0.2 * v)

    h = jnp.einsum("bihw,oi->bohw", x, w1) + b1[None, :, None, None]
    h = leaky(h)
    h = jnp.einsum("bihw,oi->bohw", h, w2) + b2[None, :, None, None]
    h = leaky(h)
    h = h + jnp.concatenate([x] * 4, axis=1)                  # repeat(1,4,1,1) residual
    ps = (
        h.reshape(B, C, 2, 2, H, W)
        .transpose(0, 1, 4, 2, 5, 3)
        .reshape(B, C, 2 * H, 2 * W)
    )
    pad = jnp.pad(ps, ((0, 0), (0, 0), (1, 1), (1, 1)), mode="reflect")
    taps = jnp.array([[1, 2, 1], [2, 4, 2], [1, 2, 1]], jnp.float32) / 16.0
    out = jnp.zeros_like(ps)
    for di in range(3):
        for dj in range(3):
            out = out + taps[di, dj] * pad[:, :, di:di + 2 * H, dj:dj + 2 * W]
    return out


if __name__ == "__main__":
    B, C, H, W = 2, 4, 16, 16
    key = jax.random.PRNGKey(0)
    kx, k1, k2, k3, k4 = jax.random.split(key, 5)

    x = jax.random.normal(kx, (B, C, H, W), jnp.float32)

    # Conv2d(C, 2C, 1) and Conv2d(2C, 4C, 1) weights, deterministic init.
    w1 = 0.2 * jax.random.normal(k1, (2 * C, C), jnp.float32)      # [out, in]
    b1 = 0.1 * jax.random.normal(k2, (2 * C,), jnp.float32)
    w2 = 0.2 * jax.random.normal(k3, (4 * C, 2 * C), jnp.float32)
    b2 = 0.1 * jax.random.normal(k4, (4 * C,), jnp.float32)

    params = {
        "w1": w1,                       # [2C, C]
        "b1": b1.reshape(2 * C, 1),     # column bias, broadcasts over lanes
        "w2": w2,                       # [4C, 2C]
        "b2": b2.reshape(4 * C, 1),
    }

    out = jax.jit(pixel_shuffle_upsample)(x, params)
    out = jax.block_until_ready(out)
    assert out.shape == (B, C, 2 * H, 2 * W), out.shape

    ref = reference_forward(x, params)
    err = float(jnp.max(jnp.abs(out - ref)))
    assert jnp.allclose(out, ref, atol=1e-5, rtol=1e-4), err

    print("KERNEL_OK")
</pallas_src>

<mosaic_0001>
module attributes {stable_mosaic.version = 11 : i64} {
  func.func @_conv_kernel(%arg0: i32, %arg1: i32, %arg2: memref<1x4x256xf32, #tpu.memory_space<vmem>>, %arg3: memref<8x4xf32, #tpu.memory_space<vmem>>, %arg4: memref<8x1xf32, #tpu.memory_space<vmem>>, %arg5: memref<16x8xf32, #tpu.memory_space<vmem>>, %arg6: memref<16x1xf32, #tpu.memory_space<vmem>>, %arg7: memref<1x16x256xf32, #tpu.memory_space<vmem>>) attributes {dimension_semantics = [#tpu.dimension_semantics<parallel>, #tpu.dimension_semantics<parallel>], iteration_bounds = array<i64: 2, 1>, scalar_prefetch = 0 : i64, scratch_operands = 0 : i64, tpu.core_type = #tpu.core_type<tc>, window_params = [{transform_indices = @transform_0, window_bounds = array<i64: 1, 4, 256>}, {pipeline_mode = #tpu.pipeline_mode<synchronous>, transform_indices = @transform_1, window_bounds = array<i64: 8, 4>}, {pipeline_mode = #tpu.pipeline_mode<synchronous>, transform_indices = @transform_2, window_bounds = array<i64: 8, 1>}, {pipeline_mode = #tpu.pipeline_mode<synchronous>, transform_indices = @transform_3, window_bounds = array<i64: 16, 8>}, {pipeline_mode = #tpu.pipeline_mode<synchronous>, transform_indices = @transform_4, window_bounds = array<i64: 16, 1>}, {transform_indices = @transform_5, window_bounds = array<i64: 1, 16, 256>}]} {
    %c0 = arith.constant 0 : index
    %c0_0 = arith.constant 0 : index
    %c0_1 = arith.constant 0 : index
    %0 = vector.load %arg2[%c0, %c0_0, %c0_1] : memref<1x4x256xf32, #tpu.memory_space<vmem>>, vector<1x4x256xf32>
    %1 = vector.shape_cast %0 : vector<1x4x256xf32> to vector<4x256xf32>
    %c0_2 = arith.constant 0 : index
    %c0_3 = arith.constant 0 : index
    %2 = vector.load %arg3[%c0_2, %c0_3] : memref<8x4xf32, #tpu.memory_space<vmem>>, vector<8x4xf32>
    %cst = arith.constant dense<0.000000e+00> : vector<8x256xf32>
    %3 = tpu.matmul %2, %1, %cst {dimension_numbers = #tpu.dot_dimension_numbers<[1], [0], [0], [1], [0, 0, 1, 1], [], []>} : vector<8x4xf32>, vector<4x256xf32>, vector<8x256xf32> -> vector<8x256xf32>
    %c0_4 = arith.constant 0 : index
    %c0_5 = arith.constant 0 : index
    %4 = vector.load %arg4[%c0_4, %c0_5] : memref<8x1xf32, #tpu.memory_space<vmem>>, vector<8x1xf32>
    %5 = vector.broadcast %4 : vector<8x1xf32> to vector<8x256xf32>
    %6 = arith.addf %3, %5 : vector<8x256xf32>
    %cst_6 = arith.constant 0.000000e+00 : f32
    %7 = vector.broadcast %cst_6 : f32 to vector<8x256xf32>
    %8 = arith.cmpf ogt, %6, %7 : vector<8x256xf32>
    %cst_7 = arith.constant 2.000000e-01 : f32
    %9 = vector.broadcast %cst_7 : f32 to vector<8x256xf32>
    %10 = arith.mulf %9, %6 : vector<8x256xf32>
    %11 = arith.select %8, %6, %10 : vector<8x256xi1>, vector<8x256xf32>
    %c0_8 = arith.constant 0 : index
    %c0_9 = arith.constant 0 : index
    %12 = vector.load %arg5[%c0_8, %c0_9] : memref<16x8xf32, #tpu.memory_space<vmem>>, vector<16x8xf32>
    %cst_10 = arith.constant dense<0.000000e+00> : vector<16x256xf32>
    %13 = tpu.matmul %12, %11, %cst_10 {dimension_numbers = #tpu.dot_dimension_numbers<[1], [0], [0], [1], [0, 0, 1, 1], [], []>} : vector<16x8xf32>, vector<8x256xf32>, vector<16x256xf32> -> vector<16x256xf32>
    %c0_11 = arith.constant 0 : index
    %c0_12 = arith.constant 0 : index
    %14 = vector.load %arg6[%c0_11, %c0_12] : memref<16x1xf32, #tpu.memory_space<vmem>>, vector<16x1xf32>
    %15 = vector.broadcast %14 : vector<16x1xf32> to vector<16x256xf32>
    %16 = arith.addf %13, %15 : vector<16x256xf32>
    %cst_13 = arith.constant 0.000000e+00 : f32
    %17 = vector.broadcast %cst_13 : f32 to vector<16x256xf32>
    %18 = arith.cmpf ogt, %16, %17 : vector<16x256xf32>
    %cst_14 = arith.constant 2.000000e-01 : f32
    %19 = vector.broadcast %cst_14 : f32 to vector<16x256xf32>
    %20 = arith.mulf %19, %16 : vector<16x256xf32>
    %21 = arith.select %18, %16, %20 : vector<16x256xi1>, vector<16x256xf32>
    %22 = vector.extract_strided_slice %21 {offsets = [0, 0], sizes = [4, 256], strides = [1, 1]} : vector<16x256xf32> to vector<4x256xf32>
    %23 = arith.addf %22, %1 : vector<4x256xf32>
    %c0_15 = arith.constant 0 : index
    %c0_16 = arith.constant 0 : index
    %c0_17 = arith.constant 0 : index
    %24 = vector.load %arg7[%c0_15, %c0_16, %c0_17] : memref<1x16x256xf32, #tpu.memory_space<vmem>>, vector<1x4x256xf32>
    %25 = vector.shape_cast %24 : vector<1x4x256xf32> to vector<4x256xf32>
    %26 = vector.shape_cast %23 : vector<4x256xf32> to vector<1x4x256xf32>
    tpu.vector_store %arg7[%c0_15, %c0_16, %c0_17], %26 {strides = array<i32>} : memref<1x16x256xf32, #tpu.memory_space<vmem>>, vector<1x4x256xf32>,
    %27 = vector.extract_strided_slice %21 {offsets = [4, 0], sizes = [4, 256], strides = [1, 1]} : vector<16x256xf32> to vector<4x256xf32>
    %28 = arith.addf %27, %1 : vector<4x256xf32>
    %c0_18 = arith.constant 0 : index
    %c4 = arith.constant 4 : index
    %c0_19 = arith.constant 0 : index
    %29 = vector.load %arg7[%c0_18, %c4, %c0_19] : memref<1x16x256xf32, #tpu.memory_space<vmem>>, vector<1x4x256xf32>
    %30 = vector.shape_cast %29 : vector<1x4x256xf32> to vector<4x256xf32>
    %31 = vector.shape_cast %28 : vector<4x256xf32> to vector<1x4x256xf32>
    tpu.vector_store %arg7[%c0_18, %c4, %c0_19], %31 {strides = array<i32>} : memref<1x16x256xf32, #tpu.memory_space<vmem>>, vector<1x4x256xf32>,
    %32 = vector.extract_strided_slice %21 {offsets = [8, 0], sizes = [4, 256], strides = [1, 1]} : vector<16x256xf32> to vector<4x256xf32>
    %33 = arith.addf %32, %1 : vector<4x256xf32>
    %c0_20 = arith.constant 0 : index
    %c8 = arith.constant 8 : index
    %c0_21 = arith.constant 0 : index
    %34 = vector.load %arg7[%c0_20, %c8, %c0_21] : memref<1x16x256xf32, #tpu.memory_space<vmem>>, vector<1x4x256xf32>
    %35 = vector.shape_cast %34 : vector<1x4x256xf32> to vector<4x256xf32>
    %36 = vector.shape_cast %33 : vector<4x256xf32> to vector<1x4x256xf32>
    tpu.vector_store %arg7[%c0_20, %c8, %c0_21], %36 {strides = array<i32>} : memref<1x16x256xf32, #tpu.memory_space<vmem>>, vector<1x4x256xf32>,
    %37 = vector.extract_strided_slice %21 {offsets = [12, 0], sizes = [4, 256], strides = [1, 1]} : vector<16x256xf32> to vector<4x256xf32>
    %38 = arith.addf %37, %1 : vector<4x256xf32>
    %c0_22 = arith.constant 0 : index
    %c12 = arith.constant 12 : index
    %c0_23 = arith.constant 0 : index
    %39 = vector.load %arg7[%c0_22, %c12, %c0_23] : memref<1x16x256xf32, #tpu.memory_space<vmem>>, vector<1x4x256xf32>
    %40 = vector.shape_cast %39 : vector<1x4x256xf32> to vector<4x256xf32>
    %41 = vector.shape_cast %38 : vector<4x256xf32> to vector<1x4x256xf32>
    tpu.vector_store %arg7[%c0_22, %c12, %c0_23], %41 {strides = array<i32>} : memref<1x16x256xf32, #tpu.memory_space<vmem>>, vector<1x4x256xf32>,
    return
  }
  func.func @transform_0(%arg0: i32, %arg1: i32) -> (i32, i32, i32) {
    %c0_i32 = arith.constant 0 : i32
    %c0_i32_0 = arith.constant 0 : i32
    return %arg0, %c0_i32, %arg1 : i32, i32, i32
  }
  func.func @transform_1(%arg0: i32, %arg1: i32) -> (i32, i32) {
    %c0_i32 = arith.constant 0 : i32
    %c0_i32_0 = arith.constant 0 : i32
    %c0_i32_1 = arith.constant 0 : i32
    return %c0_i32, %c0_i32_0 : i32, i32
  }
  func.func @transform_2(%arg0: i32, %arg1: i32) -> (i32, i32) {
    %c0_i32 = arith.constant 0 : i32
    %c0_i32_0 = arith.constant 0 : i32
    %c0_i32_1 = arith.constant 0 : i32
    return %c0_i32, %c0_i32_0 : i32, i32
  }
  func.func @transform_3(%arg0: i32, %arg1: i32) -> (i32, i32) {
    %c0_i32 = arith.constant 0 : i32
    %c0_i32_0 = arith.constant 0 : i32
    %c0_i32_1 = arith.constant 0 : i32
    return %c0_i32, %c0_i32_0 : i32, i32
  }
  func.func @transform_4(%arg0: i32, %arg1: i32) -> (i32, i32) {
    %c0_i32 = arith.constant 0 : i32
    %c0_i32_0 = arith.constant 0 : i32
    %c0_i32_1 = arith.constant 0 : i32
    return %c0_i32, %c0_i32_0 : i32, i32
  }
  func.func @transform_5(%arg0: i32, %arg1: i32) -> (i32, i32, i32) {
    %c0_i32 = arith.constant 0 : i32
    %c0_i32_0 = arith.constant 0 : i32
    return %arg0, %c0_i32, %arg1 : i32, i32, i32
  }
}

module attributes {stable_mosaic.version = 11 : i64} {
  func.func @_shuffle_blur_kernel(%arg0: i32, %arg1: i32, %arg2: memref<1x4x4x16x16xf32, #tpu.memory_space<vmem>>, %arg3: memref<64x64xf32, #tpu.memory_space<vmem>>, %arg4: memref<1x4x16x64xf32, #tpu.memory_space<vmem>>) attributes {dimension_semantics = [#tpu.dimension_semantics<parallel>, #tpu.dimension_semantics<parallel>], iteration_bounds = array<i64: 2, 1>, scalar_prefetch = 0 : i64, scratch_operands = 0 : i64, tpu.core_type = #tpu.core_type<tc>, window_params = [{transform_indices = @transform_0, window_bounds = array<i64: 1, 4, 4, 16, 16>}, {pipeline_mode = #tpu.pipeline_mode<synchronous>, transform_indices = @transform_1, window_bounds = array<i64: 64, 64>}, {transform_indices = @transform_2, window_bounds = array<i64: 1, 4, 16, 64>}]} {
    %c0 = arith.constant 0 : index
    %c0_0 = arith.constant 0 : index
    %c0_1 = arith.constant 0 : index
    %c0_2 = arith.constant 0 : index
    %c0_3 = arith.constant 0 : index
    %0 = vector.load %arg2[%c0, %c0_0, %c0_1, %c0_2, %c0_3] : memref<1x4x4x16x16xf32, #tpu.memory_space<vmem>>, vector<1x4x4x16x16xf32>
    %1 = vector.shape_cast %0 : vector<1x4x4x16x16xf32> to vector<4x4x16x16xf32>
    %2 = vector.extract_strided_slice %1 {offsets = [0, 0, 0, 0], sizes = [4, 1, 16, 16], strides = [1, 1, 1, 1]} : vector<4x4x16x16xf32> to vector<4x1x16x16xf32>
    %3 = vector.shape_cast %2 : vector<4x1x16x16xf32> to vector<4x16x16xf32>
    %4 = vector.extract_strided_slice %1 {offsets = [0, 1, 0, 0], sizes = [4, 1, 16, 16], strides = [1, 1, 1, 1]} : vector<4x4x16x16xf32> to vector<4x1x16x16xf32>
    %5 = vector.shape_cast %4 : vector<4x1x16x16xf32> to vector<4x16x16xf32>
    %6 = vector.extract_strided_slice %1 {offsets = [0, 2, 0, 0], sizes = [4, 1, 16, 16], strides = [1, 1, 1, 1]} : vector<4x4x16x16xf32> to vector<4x1x16x16xf32>
    %7 = vector.shape_cast %6 : vector<4x1x16x16xf32> to vector<4x16x16xf32>
    %8 = vector.extract_strided_slice %1 {offsets = [0, 3, 0, 0], sizes = [4, 1, 16, 16], strides = [1, 1, 1, 1]} : vector<4x4x16x16xf32> to vector<4x1x16x16xf32>
    %9 = vector.shape_cast %8 : vector<4x1x16x16xf32> to vector<4x16x16xf32>
    %10 = vector.extract_strided_slice %7 {offsets = [0, 0, 0], sizes = [4, 1, 16], strides = [1, 1, 1]} : vector<4x16x16xf32> to vector<4x1x16xf32>
    %11 = vector.extract_strided_slice %7 {offsets = [0, 0, 0], sizes = [4, 15, 16], strides = [1, 1, 1]} : vector<4x16x16xf32> to vector<4x15x16xf32>
    %12 = tpu.concatenate %10, %11 in 1 : vector<4x1x16xf32>, vector<4x15x16xf32> -> vector<4x16x16xf32>
    %cst = arith.constant 2.000000e+00 : f32
    %13 = vector.broadcast %cst : f32 to vector<4x16x16xf32>
    %14 = arith.mulf %13, %3 : vector<4x16x16xf32>
    %15 = arith.addf %12, %14 : vector<4x16x16xf32>
    %16 = arith.addf %15, %7 : vector<4x16x16xf32>
    %cst_4 = arith.constant 2.500000e-01 : f32
    %17 = vector.broadcast %cst_4 : f32 to vector<4x16x16xf32>
    %18 = arith.mulf %16, %17 : vector<4x16x16xf32>
    %19 = vector.extract_strided_slice %9 {offsets = [0, 0, 0], sizes = [4, 1, 16], strides = [1, 1, 1]} : vector<4x16x16xf32> to vector<4x1x16xf32>
    %20 = vector.extract_strided_slice %9 {offsets = [0, 0, 0], sizes = [4, 15, 16], strides = [1, 1, 1]} : vector<4x16x16xf32> to vector<4x15x16xf32>
    %21 = tpu.concatenate %19, %20 in 1 : vector<4x1x16xf32>, vector<4x15x16xf32> -> vector<4x16x16xf32>
    %cst_5 = arith.constant 2.000000e+00 : f32
    %22 = vector.broadcast %cst_5 : f32 to vector<4x16x16xf32>
    %23 = arith.mulf %22, %5 : vector<4x16x16xf32>
    %24 = arith.addf %21, %23 : vector<4x16x16xf32>
    %25 = arith.addf %24, %9 : vector<4x16x16xf32>
    %cst_6 = arith.constant 2.500000e-01 : f32
    %26 = vector.broadcast %cst_6 : f32 to vector<4x16x16xf32>
    %27 = arith.mulf %25, %26 : vector<4x16x16xf32>
    %cst_7 = arith.constant 2.000000e+00 : f32
    %28 = vector.broadcast %cst_7 : f32 to vector<4x16x16xf32>
    %29 = arith.mulf %28, %7 : vector<4x16x16xf32>
    %30 = arith.addf %3, %29 : vector<4x16x16xf32>
    %31 = vector.extract_strided_slice %3 {offsets = [0, 1, 0], sizes = [4, 15, 16], strides = [1, 1, 1]} : vector<4x16x16xf32> to vector<4x15x16xf32>
    %32 = vector.extract_strided_slice %3 {offsets = [0, 15, 0], sizes = [4, 1, 16], strides = [1, 1, 1]} : vector<4x16x16xf32> to vector<4x1x16xf32>
    %33 = tpu.concatenate %31, %32 in 1 : vector<4x15x16xf32>, vector<4x1x16xf32> -> vector<4x16x16xf32>
    %34 = arith.addf %30, %33 : vector<4x16x16xf32>
    %cst_8 = arith.constant 2.500000e-01 : f32
    %35 = vector.broadcast %cst_8 : f32 to vector<4x16x16xf32>
    %36 = arith.mulf %34, %35 : vector<4x16x16xf32>
    %cst_9 = arith.constant 2.000000e+00 : f32
    %37 = vector.broadcast %cst_9 : f32 to vector<4x16x16xf32>
    %38 = arith.mulf %37, %9 : vector<4x16x16xf32>
    %39 = arith.addf %5, %38 : vector<4x16x16xf32>
    %40 = vector.extract_strided_slice %5 {offsets = [0, 1, 0], sizes = [4, 15, 16], strides = [1, 1, 1]} : vector<4x16x16xf32> to vector<4x15x16xf32>
    %41 = vector.extract_strided_slice %5 {offsets = [0, 15, 0], sizes = [4, 1, 16], strides = [1, 1, 1]} : vector<4x16x16xf32> to vector<4x1x16xf32>
    %42 = tpu.concatenate %40, %41 in 1 : vector<4x15x16xf32>, vector<4x1x16xf32> -> vector<4x16x16xf32>
    %43 = arith.addf %39, %42 : vector<4x16x16xf32>
    %cst_10 = arith.constant 2.500000e-01 : f32
    %44 = vector.broadcast %cst_10 : f32 to vector<4x16x16xf32>
    %45 = arith.mulf %43, %44 : vector<4x16x16xf32>
    %46 = vector.extract_strided_slice %27 {offsets = [0, 0, 0], sizes = [4, 16, 1], strides = [1, 1, 1]} : vector<4x16x16xf32> to vector<4x16x1xf32>
    %47 = vector.extract_strided_slice %27 {offsets = [0, 0, 0], sizes = [4, 16, 15], strides = [1, 1, 1]} : vector<4x16x16xf32> to vector<4x16x15xf32>
    %48 = tpu.concatenate %46, %47 in 2 : vector<4x16x1xf32>, vector<4x16x15xf32> -> vector<4x16x16xf32>
    %cst_11 = arith.constant 2.000000e+00 : f32
    %49 = vector.broadcast %cst_11 : f32 to vector<4x16x16xf32>
    %50 = arith.mulf %49, %18 : vector<4x16x16xf32>
    %51 = arith.addf %48, %50 : vector<4x16x16xf32>
    %52 = arith.addf %51, %27 : vector<4x16x16xf32>
    %cst_12 = arith.constant 2.500000e-01 : f32
    %53 = vector.broadcast %cst_12 : f32 to vector<4x16x16xf32>
    %54 = arith.mulf %52, %53 : vector<4x16x16xf32>
    %cst_13 = arith.constant 2.000000e+00 : f32
    %55 = vector.broadcast %cst_13 : f32 to vector<4x16x16xf32>
    %56 = arith.mulf %55, %27 : vector<4x16x16xf32>
    %57 = arith.addf %18, %56 : vector<4x16x16xf32>
    %58 = vector.extract_strided_slice %18 {offsets = [0, 0, 1], sizes = [4, 16, 15], strides = [1, 1, 1]} : vector<4x16x16xf32> to vector<4x16x15xf32>
    %59 = vector.extract_strided_slice %18 {offsets = [0, 0, 15], sizes = [4, 16, 1], strides = [1, 1, 1]} : vector<4x16x16xf32> to vector<4x16x1xf32>
    %60 = tpu.concatenate %58, %59 in 2 : vector<4x16x15xf32>, vector<4x16x1xf32> -> vector<4x16x16xf32>
    %61 = arith.addf %57, %60 : vector<4x16x16xf32>
    %cst_14 = arith.constant 2.500000e-01 : f32
    %62 = vector.broadcast %cst_14 : f32 to vector<4x16x16xf32>
    %63 = arith.mulf %61, %62 : vector<4x16x16xf32>
    %64 = vector.extract_strided_slice %45 {offsets = [0, 0, 0], sizes = [4, 16, 1], strides = [1, 1, 1]} : vector<4x16x16xf32> to vector<4x16x1xf32>
    %65 = vector.extract_strided_slice %45 {offsets = [0, 0, 0], sizes = [4, 16, 15], strides = [1, 1, 1]} : vector<4x16x16xf32> to vector<4x16x15xf32>
    %66 = tpu.concatenate %64, %65 in 2 : vector<4x16x1xf32>, vector<4x16x15xf32> -> vector<4x16x16xf32>
    %cst_15 = arith.constant 2.000000e+00 : f32
    %67 = vector.broadcast %cst_15 : f32 to vector<4x16x16xf32>
    %68 = arith.mulf %67, %36 : vector<4x16x16xf32>
    %69 = arith.addf %66, %68 : vector<4x16x16xf32>
    %70 = arith.addf %69, %45 : vector<4x16x16xf32>
    %cst_16 = arith.constant 2.500000e-01 : f32
    %71 = vector.broadcast %cst_16 : f32 to vector<4x16x16xf32>
    %72 = arith.mulf %70, %71 : vector<4x16x16xf32>
    %cst_17 = arith.constant 2.000000e+00 : f32
    %73 = vector.broadcast %cst_17 : f32 to vector<4x16x16xf32>
    %74 = arith.mulf %73, %45 : vector<4x16x16xf32>
    %75 = arith.addf %36, %74 : vector<4x16x16xf32>
    %76 = vector.extract_strided_slice %36 {offsets = [0, 0, 1], sizes = [4, 16, 15], strides = [1, 1, 1]} : vector<4x16x16xf32> to vector<4x16x15xf32>
    %77 = vector.extract_strided_slice %36 {offsets = [0, 0, 15], sizes = [4, 16, 1], strides = [1, 1, 1]} : vector<4x16x16xf32> to vector<4x16x1xf32>
    %78 = tpu.concatenate %76, %77 in 2 : vector<4x16x15xf32>, vector<4x16x1xf32> -> vector<4x16x16xf32>
    %79 = arith.addf %75, %78 : vector<4x16x16xf32>
    %cst_18 = arith.constant 2.500000e-01 : f32
    %80 = vector.broadcast %cst_18 : f32 to vector<4x16x16xf32>
    %81 = arith.mulf %79, %80 : vector<4x16x16xf32>
    %82 = tpu.concatenate %54, %63, %72, %81 in 2 : vector<4x16x16xf32>, vector<4x16x16xf32>, vector<4x16x16xf32>, vector<4x16x16xf32> -> vector<4x16x64xf32>
    %83 = vector.shape_cast %82 : vector<4x16x64xf32> to vector<64x64xf32>
    %c0_19 = arith.constant 0 : index
    %c0_20 = arith.constant 0 : index
    %84 = vector.load %arg3[%c0_19, %c0_20] : memref<64x64xf32, #tpu.memory_space<vmem>>, vector<64x64xf32>
    %cst_21 = arith.constant dense<0.000000e+00> : vector<64x64xf32>
    %85 = tpu.matmul %83, %84, %cst_21 {dimension_numbers = #tpu.dot_dimension_numbers<[1], [0], [0], [1], [0, 0, 1, 1], [], []>} : vector<64x64xf32>, vector<64x64xf32>, vector<64x64xf32> -> vector<64x64xf32>
    %86 = vector.shape_cast %85 : vector<64x64xf32> to vector<4x16x64xf32>
    %c0_22 = arith.constant 0 : index
    %c0_23 = arith.constant 0 : index
    %c0_24 = arith.constant 0 : index
    %c0_25 = arith.constant 0 : index
    %87 = vector.load %arg4[%c0_22, %c0_23, %c0_24, %c0_25] : memref<1x4x16x64xf32, #tpu.memory_space<vmem>>, vector<1x4x16x64xf32>
    %88 = vector.shape_cast %87 : vector<1x4x16x64xf32> to vector<4x16x64xf32>
    %89 = vector.shape_cast %86 : vector<4x16x64xf32> to vector<1x4x16x64xf32>
    tpu.vector_store %arg4[%c0_22, %c0_23, %c0_24, %c0_25], %89 {strides = array<i32>} : memref<1x4x16x64xf32, #tpu.memory_space<vmem>>, vector<1x4x16x64xf32>,
    return
  }
  func.func @transform_0(%arg0: i32, %arg1: i32) -> (i32, i32, i32, i32, i32) {
    %c0_i32 = arith.constant 0 : i32
    %c0_i32_0 = arith.constant 0 : i32
    %c0_i32_1 = arith.constant 0 : i32
    %c0_i32_2 = arith.constant 0 : i32
    return %arg0, %arg1, %c0_i32, %c0_i32_0, %c0_i32_1 : i32, i32, i32, i32, i32
  }
  func.func @transform_1(%arg0: i32, %arg1: i32) -> (i32, i32) {
    %c0_i32 = arith.constant 0 : i32
    %c0_i32_0 = arith.constant 0 : i32
    %c0_i32_1 = arith.constant 0 : i32
    return %c0_i32, %c0_i32_0 : i32, i32
  }
  func.func @transform_2(%arg0: i32, %arg1: i32) -> (i32, i32, i32, i32) {
    %c0_i32 = arith.constant 0 : i32
    %c0_i32_0 = arith.constant 0 : i32
    %c0_i32_1 = arith.constant 0 : i32
    return %arg0, %arg1, %c0_i32, %c0_i32_0 : i32, i32, i32, i32
  }
}

</mosaic_0001>

<llo_original>
// kernel: pixel_shuffle_upsample.2
$region0: #{pixel_shuffle_upsample.2}
  #allocation0 [shape = 'u32[]', space=smem, size = 0x4, offset = 0x4, fixed_abs, tag = 'smem constant byte address 0x4 - core index']
  #allocation1 [shape = 'u32[72,128]{1,0:T(1,128)}', space=vmem, size = 0x9000, scoped, tag = 'internal scratch']
  %s0 = inlined_call_operand.vmem [shape: f32[2,4,256], index: 0, kind: input, shape index: {}]
  %s1 = inlined_call_operand.vmem [shape: f32[8,4], index: 1, kind: input, shape index: {}]
  %s2 = inlined_call_operand.vmem [shape: f32[8,1], index: 2, kind: input, shape index: {}]
  %s3 = inlined_call_operand.vmem [shape: f32[16,8], index: 3, kind: input, shape index: {}]
  %s4 = inlined_call_operand.vmem [shape: f32[16,1], index: 4, kind: input, shape index: {}]
  %s5 = inlined_call_operand.vmem [shape: f32[2,16,256], index: 5, kind: output, shape index: {}]
  %s6 = sld [smem:[#allocation0]]
  $region53: #{pixel_shuffle_upsample.2} parent=0
    _
  %s8 = ssub.s32 1, %s6
  %s9 = scalar_select 0, %s8, %s6
  loop: start=0, step=1, limit=4
  $region2: #{pixel_shuffle_upsample.2} parent=0 // loop_pre_header
    _
  $region3: #{pixel_shuffle_upsample.2} parent=0 // loop_header
    %s11 = sphi 0, %s15
    %p12 = scmp.ge.s32.totalorder %s11, 4
    %s18 = sphi 0, %s30
    %s19 = sphi 0, %s26
    %s20 = sphi 0, %s18
    %s21 = sphi 0, %s19
    %s22 = sphi 0, %s20
    %s23 = sphi 0, %s21
    %s35 = sphi 0, %s37
    %s38 = sphi 0, %s35
    %s39 = sphi 0, %s38
    %s55 = sphi 0, %s39
    %s59 = sphi 0, %s59
    %s61 = sphi 0, %s59
    %s62 = sphi 0, %s61
    %s76 = sphi 0, %s62
    %s80 = sphi 0, %s80
    %s82 = sphi 0, %s80
    %s83 = sphi 0, %s82
    %s97 = sphi 0, %s83
    %s101 = sphi 0, %s101
    %s103 = sphi 0, %s101
    %s104 = sphi 0, %s103
    %s118 = sphi 0, %s104
    %s122 = sphi 0, %s122
    %s124 = sphi 0, %s122
    %s125 = sphi 0, %s124
    %s139 = sphi 0, %s125
    %s147 = sphi 0, %s149
    %s150 = sphi 0, %s147
    %s151 = sphi 0, %s150
    %s167 = sphi 0, %s151
  $region4: #{pixel_shuffle_upsample.2} parent=0 // loop_header_branch
    %14 = sbr.rel (%p12) target = $region8
  $region5: #{pixel_shuffle_upsample.2} parent=0 // loop_body
    %s16 = ssub.s32 %s11, 1
    %s17 = ssub.s32 %s11, 2
    %s24 = sadd.s32 1, %s19
    %p25 = scmp.ge.s32.totalorder %s24, 1
    %s26 = scalar_select %p25, 0, %s24
    %s27 = sadd.s32 1, %s18
    %s28 = scalar_select %p25, %s27, %s18
    %p29 = scmp.ge.s32.totalorder %s28, 2
    %s30 = scalar_select %p29, 0, %s28
    %s31 = ssub.s32 %s18, %s30
    %s32 = ssub.s32 %s19, %s26
    %s33 = sor.u32 %s31, %s32
    %p34 = scmp.eq.s32.totalorder %s33, 0
    %s36 = sadd.s32 %s35, 1
    %s37 = scalar_select %p34, %s35, %s36
    %p40 = pneg %p34
    %p41 = scmp.eq.s32.totalorder %s11, 1
    %p42 = por %p40, %p41
    %p43 = scmp.ne.s32.totalorder %s35, %s38
    %p44 = scmp.eq.s32.totalorder %s11, 0
    %p45 = por %p43, %p44
    %p46 = scmp.ne.s32.totalorder %s35, %s38
    %p47 = scmp.eq.s32.totalorder %s16, 1
    %p48 = por %p46, %p47
    %p49 = scmp.ne.s32.totalorder %s38, %s39
    %p50 = scmp.eq.s32.totalorder %s16, 0
    %p51 = por %p49, %p50
    %p52 = scmp.ne.s32.totalorder %s38, %s39
    %p53 = scmp.eq.s32.totalorder %s17, 1
    %p54 = por %p52, %p53
    %p56 = scmp.ne.s32.totalorder %s39, %s55
    %p57 = scmp.eq.s32.totalorder %s17, 0
    %p58 = por %p56, %p57
    %s60 = sadd.s32 %s59, 1
    %p63 = scmp.eq.s32.totalorder %s11, 1
    %p64 = scmp.ne.s32.totalorder %s59, %s61
    %p65 = scmp.eq.s32.totalorder %s11, 0
    %p66 = por %p64, %p65
    %p67 = scmp.ne.s32.totalorder %s59, %s61
    %p68 = scmp.eq.s32.totalorder %s16, 1
    %p69 = por %p67, %p68
    %p70 = scmp.ne.s32.totalorder %s61, %s62
    %p71 = scmp.eq.s32.totalorder %s16, 0
    %p72 = por %p70, %p71
    %p73 = scmp.ne.s32.totalorder %s61, %s62
    %p74 = scmp.eq.s32.totalorder %s17, 1
    %p75 = por %p73, %p74
    %p77 = scmp.ne.s32.totalorder %s62, %s76
    %p78 = scmp.eq.s32.totalorder %s17, 0
    %p79 = por %p77, %p78
    %s81 = sadd.s32 %s80, 1
    %p84 = scmp.eq.s32.totalorder %s11, 1
    %p85 = scmp.ne.s32.totalorder %s80, %s82
    %p86 = scmp.eq.s32.totalorder %s11, 0
    %p87 = por %p85, %p86
    %p88 = scmp.ne.s32.totalorder %s80, %s82
    %p89 = scmp.eq.s32.totalorder %s16, 1
    %p90 = por %p88, %p89
    %p91 = scmp.ne.s32.totalorder %s82, %s83
    %p92 = scmp.eq.s32.totalorder %s16, 0
    %p93 = por %p91, %p92
    %p94 = scmp.ne.s32.totalorder %s82, %s83
    %p95 = scmp.eq.s32.totalorder %s17, 1
    %p96 = por %p94, %p95
    %p98 = scmp.ne.s32.totalorder %s83, %s97
    %p99 = scmp.eq.s32.totalorder %s17, 0
    %p100 = por %p98, %p99
    %s102 = sadd.s32 %s101, 1
    %p105 = scmp.eq.s32.totalorder %s11, 1
    %p106 = scmp.ne.s32.totalorder %s101, %s103
    %p107 = scmp.eq.s32.totalorder %s11, 0
    %p108 = por %p106, %p107
    %p109 = scmp.ne.s32.totalorder %s101, %s103
    %p110 = scmp.eq.s32.totalorder %s16, 1
    %p111 = por %p109, %p110
    %p112 = scmp.ne.s32.totalorder %s103, %s104
    %p113 = scmp.eq.s32.totalorder %s16, 0
    %p114 = por %p112, %p113
    %p115 = scmp.ne.s32.totalorder %s103, %s104
    %p116 = scmp.eq.s32.totalorder %s17, 1
    %p117 = por %p115, %p116
    %p119 = scmp.ne.s32.totalorder %s104, %s118
    %p120 = scmp.eq.s32.totalorder %s17, 0
    %p121 = por %p119, %p120
    %s123 = sadd.s32 %s122, 1
    %p126 = scmp.eq.s32.totalorder %s11, 1
    %p127 = scmp.ne.s32.totalorder %s122, %s124
    %p128 = scmp.eq.s32.totalorder %s11, 0
    %p129 = por %p127, %p128
    %p130 = scmp.ne.s32.totalorder %s122, %s124
    %p131 = scmp.eq.s32.totalorder %s16, 1
    %p132 = por %p130, %p131
    %p133 = scmp.ne.s32.totalorder %s124, %s125
    %p134 = scmp.eq.s32.totalorder %s16, 0
    %p135 = por %p133, %p134
    %p136 = scmp.ne.s32.totalorder %s124, %s125
    %p137 = scmp.eq.s32.totalorder %s17, 1
    %p138 = por %p136, %p137
    %p140 = scmp.ne.s32.totalorder %s125, %s139
    %p141 = scmp.eq.s32.totalorder %s17, 0
    %p142 = por %p140, %p141
    %s143 = ssub.s32 %s18, %s30
    %s144 = ssub.s32 %s19, %s26
    %s145 = sor.u32 %s143, %s144
    %p146 = scmp.eq.s32.totalorder %s145, 0
    %s148 = sadd.s32 %s147, 1
    %s149 = scalar_select %p146, %s147, %s148
    %p152 = pneg %p146
    %p153 = scmp.eq.s32.totalorder %s11, 1
    %p154 = por %p152, %p153
    %p155 = scmp.ne.s32.totalorder %s147, %s150
    %p156 = scmp.eq.s32.totalorder %s11, 0
    %p157 = por %p155, %p156
    %p158 = scmp.ne.s32.totalorder %s147, %s150
    %p159 = scmp.eq.s32.totalorder %s16, 1
    %p160 = por %p158, %p159
    %p161 = scmp.ne.s32.totalorder %s150, %s151
    %p162 = scmp.eq.s32.totalorder %s16, 0
    %p163 = por %p161, %p162
    %p164 = scmp.ne.s32.totalorder %s150, %s151
    %p165 = scmp.eq.s32.totalorder %s17, 1
    %p166 = por %p164, %p165
    %p168 = scmp.ne.s32.totalorder %s151, %s167
    %p169 = scmp.eq.s32.totalorder %s17, 0
    %p170 = por %p168, %p169
    %p171 = scmp.le.s32.totalorder 1, %s11
    %p172 = scmp.lt.s32.totalorder %s11, 3
    %p173 = pnand %p171, %p172
    %p174 = pneg %p173
    // Predicated region
    $region9: #{pixel_shuffle_upsample.2} parent=5 // pred_check
      _
    $region10: #{pixel_shuffle_upsample.2} parent=5 // pred_check_branch
      %176 = sbr.rel (%p173) target = $region12
    $region11: #{pixel_shuffle_upsample.2} parent=5 // pred_region
      %s177 = ssub.s32 %s11, 1
      // Predicated region
      $region13: #{pixel_shuffle_upsample.2} parent=11 // pred_check
        %p178 = pneg %p72
      $region14: #{pixel_shuffle_upsample.2} parent=11 // pred_check_branch
        %180 = sbr.rel (%p178) target = $region16
      $region15: #{pixel_shuffle_upsample.2} parent=11 // pred_region
        _
      $region16: #{pixel_shuffle_upsample.2} parent=11 // pred_fallthru
        _
      // Predicated region
      $region17: #{pixel_shuffle_upsample.2} parent=11 // pred_check
        %p181 = pneg %p93
      $region18: #{pixel_shuffle_upsample.2} parent=11 // pred_check_branch
        %183 = sbr.rel (%p181) target = $region20
      $region19: #{pixel_shuffle_upsample.2} parent=11 // pred_region
        _
      $region20: #{pixel_shuffle_upsample.2} parent=11 // pred_fallthru
        _
      // Predicated region
      $region21: #{pixel_shuffle_upsample.2} parent=11 // pred_check
        %p184 = pneg %p114
      $region22: #{pixel_shuffle_upsample.2} parent=11 // pred_check_branch
        %186 = sbr.rel (%p184) target = $region24
      $region23: #{pixel_shuffle_upsample.2} parent=11 // pred_region
        _
      $region24: #{pixel_shuffle_upsample.2} parent=11 // pred_fallthru
        _
      // Predicated region
      $region25: #{pixel_shuffle_upsample.2} parent=11 // pred_check
        %p187 = pneg %p135
      $region26: #{pixel_shuffle_upsample.2} parent=11 // pred_check_branch
        %189 = sbr.rel (%p187) target = $region28
      $region27: #{pixel_shuffle_upsample.2} parent=11 // pred_region
        _
      $region28: #{pixel_shuffle_upsample.2} parent=11 // pred_fallthru
        _
    $region12: #{pixel_shuffle_upsample.2} parent=5 // pred_fallthru
      _
    %p190 = scmp.lt.s32.totalorder %s11, 2
    // Predicated region
    $region29: #{pixel_shuffle_upsample.2} parent=5 // pred_check
      %p191 = pneg %p190
    $region30: #{pixel_shuffle_upsample.2} parent=5 // pred_check_branch
      %193 = sbr.rel (%p191) target = $region32
    $region31: #{pixel_shuffle_upsample.2} parent=5 // pred_region
      // Predicated region
      $region33: #{pixel_shuffle_upsample.2} parent=31 // pred_check
        %p194 = pneg %p45
      $region34: #{pixel_shuffle_upsample.2} parent=31 // pred_check_branch
        %196 = sbr.rel (%p194) target = $region36
      $region35: #{pixel_shuffle_upsample.2} parent=31 // pred_region
        %s197 = smul.u32 2, %s19
        %p198 = scmp.lt.s32.totalorder %s18, 1
        %s199 = scalar_select %p198, %s18, 1
        %p200 = scmp.lt.s32.totalorder %s197, 1
        %s201 = scalar_select %p200, %s197, 1
        %s202 = smul.addr %s199, 2
        %s203 = sadd.s32 %s201, %s202
        %s204 = smul.addr %s203, 4
        %s205 = scalar_lea.vmem %s0, %s204
        %s206 = smul.u32 2, %s19
      $region36: #{pixel_shuffle_upsample.2} parent=31 // pred_fallthru
        _
    $region32: #{pixel_shuffle_upsample.2} parent=5 // pred_fallthru
      _
    %p207 = scmp.le.s32.totalorder 1, %s11
    %p208 = scmp.lt.s32.totalorder %s11, 3
    %p209 = pnand %p207, %p208
    %p210 = pneg %p209
    // Predicated region
    $region37: #{pixel_shuffle_upsample.2} parent=5 // pred_check
      _
    $region38: #{pixel_shuffle_upsample.2} parent=5 // pred_check_branch
      %212 = sbr.rel (%p209) target = $region40
    $region39: #{pixel_shuffle_upsample.2} parent=5 // pred_region
      %s213 = ssub.s32 %s11, 1
      %s214 = smul.u32 2, %s21
      %p215 = scmp.lt.s32.totalorder %s20, 1
      %s216 = scalar_select %p215, %s20, 1
      %p217 = scmp.lt.s32.totalorder %s214, 1
      %s218 = scalar_select %p217, %s214, 1
      %s219 = smul.addr %s216, 2
      %s220 = sadd.s32 %s218, %s219
      %s221 = smul.addr %s220, 4
      %s222 = scalar_lea.vmem %s0, %s221
      %p223 = pneg %p51
      %p224 = pneg %p48
      %p225 = pneg %p72
      %p226 = pneg %p69
      %p227 = pneg %p93
      %p228 = pneg %p90
      %p229 = pneg %p114
      %p230 = pneg %p111
      %p231 = pneg %p135
      %p232 = pneg %p132
      %p233 = pneg %p163
      %p234 = pneg %p160
      %s235 = smul.u32 2, %s21
      %p236 = scmp.lt.s32.totalorder %s20, 1
      %s237 = scalar_select %p236, %s20, 1
      %p238 = scmp.lt.s32.totalorder %s235, 1
      %s239 = scalar_select %p238, %s235, 1
      %s240 = smul.addr %s237, 4
      %s241 = sadd.s32 %s239, %s240
      %s242 = smul.addr %s241, 8
      %s243 = scalar_lea.vmem %s5, %s242
      %s244 = smul.u32 2, %s21
      %p245 = scmp.lt.s32.totalorder %s20, 1
      %s246 = scalar_select %p245, %s20, 1
      %p247 = scmp.lt.s32.totalorder %s244, 1
      %s248 = scalar_select %p247, %s244, 1
      %s249 = smul.addr %s246, 2
      %s250 = sadd.s32 %s248, %s249
      %s251 = smul.addr %s250, 4
      %s252 = scalar_lea.vmem %s0, %s251
      %s253 = smul.u32 2, %s21
      %s254 = smul.u32 2, %s21
      %p255 = scmp.lt.s32.totalorder %s20, 1
      %s256 = scalar_select %p255, %s20, 1
      %p257 = scmp.lt.s32.totalorder %s254, 1
      %s258 = scalar_select %p257, %s254, 1
      %s259 = smul.addr %s256, 4
      %s260 = sadd.s32 %s258, %s259
      %s261 = smul.addr %s260, 8
      %s262 = scalar_lea.vmem %s5, %s261
      %s263 = smul.u32 2, %s21
      %v264 = vld [vmem:[%s252] sm:$0xff]
      %v265 = vld [vmem:[%s1] sm:$0xff]
      %v266 = vld [vmem:[%s2] sm:$0xff]
      %268 = vset.pattern.permute.xlu0 0
      %269 = vperm.xlu0 %268, %v266
      %v270 = vpop.permute.xlu0 %269
      %273 = vst [vmem:[#allocation1] ss:$2 sm:$0xff] %v264
      %v274 = vld.sshfl [vmem:[#allocation1] sm:$0xff pattern:$0x75316420]
      %v275 = vld.sshfl [vmem:[#allocation1 + $0x8] sm:$0xff pattern:$0x75316420]
      %vm276 = vcmask 31744
      %v278 = vsel %vm276, %v265, 0
      %vm280 = vcmask 1043456
      %v281 = vsel %vm280, %v274, 0
      %v283 = vsel %vm280, %v275, 0
      %285 = vmatpush.msra.mxu0 0.0
      %286 = vmatpush.msra.mxu0 0.0
      %287 = vmatpush.msra.mxu0 0.0
      %288 = vmatpush.msra.mxu0 0.0
      %289 = vmatpush.msra.mxu0 0.0
      %290 = vmatpush.msra.mxu0 0.0
      %291 = vmatpush.msra.mxu0 0.0
      %292 = vmatpush.msra.mxu0 0.0
      %293 = vmatpush.msra.mxu0 0.0
      %294 = vmatpush.msra.mxu0 0.0
      %295 = vmatpush.msra.mxu0 0.0
      %296 = vmatpush.msra.mxu0 0.0
      %297 = vmatpush.msra.mxu0 0.0
      %298 = vmatpush.msra.mxu0 0.0
      %299 = vmatpush.msra.mxu0 0.0
      %300 = vmatpush.msra.mxu0 %v281
      %301 = vmatmul.f32.gmra.mxu0 %v278
      %v302 = vpop.f32.mrf.mxu0
      %v303 = vadd.f32 %v270, %v302
      %304 = vdwg.mxu0
      %305 = vmatpush.msra.mxu0 0.0
      %306 = vmatpush.msra.mxu0 0.0
      %307 = vmatpush.msra.mxu0 0.0
      %308 = vmatpush.msra.mxu0 0.0
      %309 = vmatpush.msra.mxu0 0.0
      %310 = vmatpush.msra.mxu0 0.0
      %311 = vmatpush.msra.mxu0 0.0
      %312 = vmatpush.msra.mxu0 0.0
      %313 = vmatpush.msra.mxu0 0.0
      %314 = vmatpush.msra.mxu0 0.0
      %315 = vmatpush.msra.mxu0 0.0
      %316 = vmatpush.msra.mxu0 0.0
      %317 = vmatpush.msra.mxu0 0.0
      %318 = vmatpush.msra.mxu0 0.0
      %319 = vmatpush.msra.mxu0 0.0
      %320 = vmatpush.msra.mxu0 %v283
      %321 = vmatmul.f32.gmra.mxu0 %v278
      %v322 = vpop.f32.mrf.mxu0
      %v323 = vadd.f32 %v270, %v322
      %324 = vdwg.mxu0
      %vm325 = vcmp.gt.f32.partialorder %v303, 0.0
      %vm326 = vcmp.gt.f32.partialorder %v323, 0.0
      %v327 = vmul.f32 %v303, 0.2
      %v328 = vmul.f32 %v323, 0.2
      %v329 = vsel %vm325, %v303, %v327
      %v330 = vsel %vm326, %v323, %v328
      %v331 = vld [vmem:[%s3] sm:$0xff]
      %v332 = vld [vmem:[%s3 + $0x8] sm:$0xff]
      %v333 = vld [vmem:[%s4] sm:$0xff]
      %v334 = vld [vmem:[%s4 + $0x8] sm:$0xff]
      %336 = vset.pattern.permute.xlu0 0
      %337 = vperm.xlu0 %336, %v333
      %v338 = vpop.permute.xlu0 %337
      %341 = vset.pattern.permute.xlu0 0
      %342 = vperm.xlu0 %341, %v334
      %v343 = vpop.permute.xlu0 %342
      %vm345 = vcmask 64512
      %v347 = vsel %vm345, %v331, 0
      %v350 = vsel %vm345, %v332, 0
      %352 = vmatpush.msra.mxu0 0.0
      %353 = vmatpush.msra.mxu0 0.0
      %354 = vmatpush.msra.mxu0 0.0
      %355 = vmatpush.msra.mxu0 0.0
      %356 = vmatpush.msra.mxu0 0.0
      %357 = vmatpush.msra.mxu0 0.0
      %358 = vmatpush.msra.mxu0 0.0
      %359 = vmatpush.msra.mxu0 0.0
      %360 = vmatpush.msra.mxu0 0.0
      %361 = vmatpush.msra.mxu0 0.0
      %362 = vmatpush.msra.mxu0 0.0
      %363 = vmatpush.msra.mxu0 0.0
      %364 = vmatpush.msra.mxu0 0.0
      %365 = vmatpush.msra.mxu0 0.0
      %366 = vmatpush.msra.mxu0 0.0
      %367 = vmatpush.msra.mxu0 %v329
      %368 = vmatmul.f32.gmra.mxu0 %v347
      %v369 = vpop.f32.mrf.mxu0
      %v370 = vadd.f32 %v338, %v369
      %371 = vmatmul.f32.gmra.mxu0 %v350
      %v372 = vpop.f32.mrf.mxu0
      %v373 = vadd.f32 %v343, %v372
      %374 = vdwg.mxu0
      %375 = vmatpush.msra.mxu0 0.0
      %376 = vmatpush.msra.mxu0 0.0
      %377 = vmatpush.msra.mxu0 0.0
      %378 = vmatpush.msra.mxu0 0.0
      %379 = vmatpush.msra.mxu0 0.0
      %380 = vmatpush.msra.mxu0 0.0
      %381 = vmatpush.msra.mxu0 0.0
      %382 = vmatpush.msra.mxu0 0.0
      %383 = vmatpush.msra.mxu0 0.0
      %384 = vmatpush.msra.mxu0 0.0
      %385 = vmatpush.msra.mxu0 0.0
      %386 = vmatpush.msra.mxu0 0.0
      %387 = vmatpush.msra.mxu0 0.0
      %388 = vmatpush.msra.mxu0 0.0
      %389 = vmatpush.msra.mxu0 0.0
      %390 = vmatpush.msra.mxu0 %v330
      %391 = vmatmul.f32.gmra.mxu0 %v347
      %v392 = vpop.f32.mrf.mxu0
      %v393 = vadd.f32 %v338, %v392
      %394 = vmatmul.f32.gmra.mxu0 %v350
      %v395 = vpop.f32.mrf.mxu0
      %v396 = vadd.f32 %v343, %v395
      %397 = vdwg.mxu0
      %vm398 = vcmp.gt.f32.partialorder %v370, 0.0
      %vm399 = vcmp.gt.f32.partialorder %v393, 0.0
      %vm400 = vcmp.gt.f32.partialorder %v373, 0.0
      %vm401 = vcmp.gt.f32.partialorder %v396, 0.0
      %v402 = vmul.f32 %v370, 0.2
      %v403 = vmul.f32 %v393, 0.2
      %v404 = vmul.f32 %v373, 0.2
      %v405 = vmul.f32 %v396, 0.2
      %v406 = vsel %vm398, %v370, %v402
      %v407 = vsel %vm399, %v393, %v403
      %v408 = vsel %vm400, %v373, %v404
      %v409 = vsel %vm401, %v396, %v405
      %410 = vst [vmem:[#allocation1] ss:$2 sm:$0xff] %v264
      %v411 = vld.sshfl [vmem:[#allocation1] sm:$0xff pattern:$0x75316420]
      %v412 = vld.sshfl [vmem:[#allocation1 + $0x8] sm:$0xff pattern:$0x75316420]
      %v415 = vadd.f32 %v406, %v411
      %v416 = vadd.f32 %v407, %v412
      %417 = vst [vmem:[%s262] sm:$0xf] %v415
      %418 = vst [vmem:[%s262 + $0x8] sm:$0xf] %v416
      %s419 = scalar_lea.vmem [#allocation1], 1
      %420 = vst [vmem:[%s419] ss:$2 sm:$0xff] %v264
      %v421 = vld.sshfl [vmem:[#allocation1] sm:$0xff pattern:$0x75316420]
      %v422 = vld.sshfl [vmem:[#allocation1 + $0x8] sm:$0xff pattern:$0x75316420]
      %v425 = vadd.f32 %v406, %v421
      %v426 = vadd.f32 %v407, %v422
      %427 = vst [vmem:[%s262] sm:$0xf0] %v425
      %428 = vst [vmem:[%s262 + $0x8] sm:$0xf0] %v426
      %429 = vst [vmem:[#allocation1] ss:$2 sm:$0xff] %v264
      %v430 = vld.sshfl [vmem:[#allocation1] sm:$0xff pattern:$0x75316420]
      %v431 = vld.sshfl [vmem:[#allocation1 + $0x8] sm:$0xff pattern:$0x75316420]
      %v434 = vadd.f32 %v408, %v430
      %v435 = vadd.f32 %v409, %v431
      %436 = vst [vmem:[%s262 + $0x10] sm:$0xf] %v434
      %437 = vst [vmem:[%s262 + $0x18] sm:$0xf] %v435
      %s438 = scalar_lea.vmem [#allocation1], 1
      %439 = vst [vmem:[%s438] ss:$2 sm:$0xff] %v264
      %v440 = vld.sshfl [vmem:[#allocation1] sm:$0xff pattern:$0x75316420]
      %v441 = vld.sshfl [vmem:[#allocation1 + $0x8] sm:$0xff pattern:$0x75316420]
      %v444 = vadd.f32 %v408, %v440
      %v445 = vadd.f32 %v409, %v441
      %446 = vst [vmem:[%s262 + $0x10] sm:$0xf0] %v444
      %447 = vst [vmem:[%s262 + $0x18] sm:$0xf0] %v445
      %s448 = smul.u32 2, %s21
      %p449 = scmp.lt.s32.totalorder %s20, 1
      %s450 = scalar_select %p449, %s20, 1
      %p451 = scmp.lt.s32.totalorder %s448, 1
      %s452 = scalar_select %p451, %s448, 1
      %s453 = smul.addr %s450, 4
      %s454 = sadd.s32 %s452, %s453
      %s455 = smul.addr %s454, 8
      %s456 = scalar_lea.vmem %s5, %s455
      // Predicated region
      $region41: #{pixel_shuffle_upsample.2} parent=39 // pred_check
        %p457 = pneg %p160
      $region42: #{pixel_shuffle_upsample.2} parent=39 // pred_check_branch
        %459 = sbr.rel (%p457) target = $region44
      $region43: #{pixel_shuffle_upsample.2} parent=39 // pred_region
        %s460 = smul.u32 2, %s21
      $region44: #{pixel_shuffle_upsample.2} parent=39 // pred_fallthru
        _
    $region40: #{pixel_shuffle_upsample.2} parent=5 // pred_fallthru
      _
    %p461 = scmp.le.s32.totalorder 2, %s11
    // Predicated region
    $region45: #{pixel_shuffle_upsample.2} parent=5 // pred_check
      %p462 = pneg %p461
    $region46: #{pixel_shuffle_upsample.2} parent=5 // pred_check_branch
      %464 = sbr.rel (%p462) target = $region48
    $region47: #{pixel_shuffle_upsample.2} parent=5 // pred_region
      %s465 = ssub.s32 %s11, 2
      // Predicated region
      $region49: #{pixel_shuffle_upsample.2} parent=47 // pred_check
        %p466 = pneg %p166
      $region50: #{pixel_shuffle_upsample.2} parent=47 // pred_check_branch
        %468 = sbr.rel (%p466) target = $region52
      $region51: #{pixel_shuffle_upsample.2} parent=47 // pred_region
        %s469 = smul.u32 2, %s23
        %p470 = scmp.lt.s32.totalorder %s22, 1
        %s471 = scalar_select %p470, %s22, 1
        %p472 = scmp.lt.s32.totalorder %s469, 1
        %s473 = scalar_select %p472, %s469, 1
        %s474 = smul.addr %s471, 4
        %s475 = sadd.s32 %s473, %s474
        %s476 = smul.addr %s475, 8
        %s477 = scalar_lea.vmem %s5, %s476
      $region52: #{pixel_shuffle_upsample.2} parent=47 // pred_fallthru
        _
    $region48: #{pixel_shuffle_upsample.2} parent=5 // pred_fallthru
      _
  $region6: #{pixel_shuffle_upsample.2} parent=0 // loop_footer
    %s15 = sadd.s32 1, %s11
  $region7: #{pixel_shuffle_upsample.2} parent=0 // loop_footer_branch
    %10 = sbr.rel target = $region3
  $region8: #{pixel_shuffle_upsample.2} parent=0 // loop_exit
    _

// kernel: pixel_shuffle_upsample.3
$region0: #{pixel_shuffle_upsample.3}
  #allocation0 [shape = 'u32[]', space=smem, size = 0x4, offset = 0x4, fixed_abs, tag = 'smem constant byte address 0x4 - core index']
  #allocation1 [shape = 'u32[72,128]{1,0:T(1,128)}', space=vmem, size = 0x9000, scoped, tag = 'internal scratch']
  %s0 = inlined_call_operand.vmem [shape: f32[2,4,4,16,16], index: 0, kind: input, shape index: {}]
  %s1 = inlined_call_operand.vmem [shape: f32[64,64], index: 1, kind: input, shape index: {}]
  %s2 = inlined_call_operand.vmem [shape: f32[2,4,16,64], index: 2, kind: output, shape index: {}]
  %s3 = sld [smem:[#allocation0]]
  $region41: #{pixel_shuffle_upsample.3} parent=0
    _
  %s5 = ssub.s32 1, %s3
  %s6 = scalar_select 0, %s5, %s3
  loop: start=0, step=1, limit=4
  $region2: #{pixel_shuffle_upsample.3} parent=0 // loop_pre_header
    _
  $region3: #{pixel_shuffle_upsample.3} parent=0 // loop_header
    %s8 = sphi 0, %s12
    %p9 = scmp.ge.s32.totalorder %s8, 4
    %s15 = sphi 0, %s27
    %s16 = sphi 0, %s23
    %s17 = sphi 0, %s15
    %s18 = sphi 0, %s16
    %s19 = sphi 0, %s17
    %s20 = sphi 0, %s18
    %s32 = sphi 0, %s34
    %s35 = sphi 0, %s32
    %s36 = sphi 0, %s35
    %s52 = sphi 0, %s36
    %s56 = sphi 0, %s56
    %s58 = sphi 0, %s56
    %s59 = sphi 0, %s58
    %s73 = sphi 0, %s59
    %s81 = sphi 0, %s83
    %s84 = sphi 0, %s81
    %s85 = sphi 0, %s84
    %s101 = sphi 0, %s85
  $region4: #{pixel_shuffle_upsample.3} parent=0 // loop_header_branch
    %11 = sbr.rel (%p9) target = $region8
  $region5: #{pixel_shuffle_upsample.3} parent=0 // loop_body
    %s13 = ssub.s32 %s8, 1
    %s14 = ssub.s32 %s8, 2
    %s21 = sadd.s32 1, %s16
    %p22 = scmp.ge.s32.totalorder %s21, 1
    %s23 = scalar_select %p22, 0, %s21
    %s24 = sadd.s32 1, %s15
    %s25 = scalar_select %p22, %s24, %s15
    %p26 = scmp.ge.s32.totalorder %s25, 2
    %s27 = scalar_select %p26, 0, %s25
    %s28 = ssub.s32 %s15, %s27
    %s29 = ssub.s32 %s16, %s23
    %s30 = sor.u32 %s28, %s29
    %p31 = scmp.eq.s32.totalorder %s30, 0
    %s33 = sadd.s32 %s32, 1
    %s34 = scalar_select %p31, %s32, %s33
    %p37 = pneg %p31
    %p38 = scmp.eq.s32.totalorder %s8, 1
    %p39 = por %p37, %p38
    %p40 = scmp.ne.s32.totalorder %s32, %s35
    %p41 = scmp.eq.s32.totalorder %s8, 0
    %p42 = por %p40, %p41
    %p43 = scmp.ne.s32.totalorder %s32, %s35
    %p44 = scmp.eq.s32.totalorder %s13, 1
    %p45 = por %p43, %p44
    %p46 = scmp.ne.s32.totalorder %s35, %s36
    %p47 = scmp.eq.s32.totalorder %s13, 0
    %p48 = por %p46, %p47
    %p49 = scmp.ne.s32.totalorder %s35, %s36
    %p50 = scmp.eq.s32.totalorder %s14, 1
    %p51 = por %p49, %p50
    %p53 = scmp.ne.s32.totalorder %s36, %s52
    %p54 = scmp.eq.s32.totalorder %s14, 0
    %p55 = por %p53, %p54
    %s57 = sadd.s32 %s56, 1
    %p60 = scmp.eq.s32.totalorder %s8, 1
    %p61 = scmp.ne.s32.totalorder %s56, %s58
    %p62 = scmp.eq.s32.totalorder %s8, 0
    %p63 = por %p61, %p62
    %p64 = scmp.ne.s32.totalorder %s56, %s58
    %p65 = scmp.eq.s32.totalorder %s13, 1
    %p66 = por %p64, %p65
    %p67 = scmp.ne.s32.totalorder %s58, %s59
    %p68 = scmp.eq.s32.totalorder %s13, 0
    %p69 = por %p67, %p68
    %p70 = scmp.ne.s32.totalorder %s58, %s59
    %p71 = scmp.eq.s32.totalorder %s14, 1
    %p72 = por %p70, %p71
    %p74 = scmp.ne.s32.totalorder %s59, %s73
    %p75 = scmp.eq.s32.totalorder %s14, 0
    %p76 = por %p74, %p75
    %s77 = ssub.s32 %s15, %s27
    %s78 = ssub.s32 %s16, %s23
    %s79 = sor.u32 %s77, %s78
    %p80 = scmp.eq.s32.totalorder %s79, 0
    %s82 = sadd.s32 %s81, 1
    %s83 = scalar_select %p80, %s81, %s82
    %p86 = pneg %p80
    %p87 = scmp.eq.s32.totalorder %s8, 1
    %p88 = por %p86, %p87
    %p89 = scmp.ne.s32.totalorder %s81, %s84
    %p90 = scmp.eq.s32.totalorder %s8, 0
    %p91 = por %p89, %p90
    %p92 = scmp.ne.s32.totalorder %s81, %s84
    %p93 = scmp.eq.s32.totalorder %s13, 1
    %p94 = por %p92, %p93
    %p95 = scmp.ne.s32.totalorder %s84, %s85
    %p96 = scmp.eq.s32.totalorder %s13, 0
    %p97 = por %p95, %p96
    %p98 = scmp.ne.s32.totalorder %s84, %s85
    %p99 = scmp.eq.s32.totalorder %s14, 1
    %p100 = por %p98, %p99
    %p102 = scmp.ne.s32.totalorder %s85, %s101
    %p103 = scmp.eq.s32.totalorder %s14, 0
    %p104 = por %p102, %p103
    %p105 = scmp.le.s32.totalorder 1, %s8
    %p106 = scmp.lt.s32.totalorder %s8, 3
    %p107 = pnand %p105, %p106
    %p108 = pneg %p107
    // Predicated region
    $region9: #{pixel_shuffle_upsample.3} parent=5 // pred_check
      _
    $region10: #{pixel_shuffle_upsample.3} parent=5 // pred_check_branch
      %110 = sbr.rel (%p107) target = $region12
    $region11: #{pixel_shuffle_upsample.3} parent=5 // pred_region
      %s111 = ssub.s32 %s8, 1
      // Predicated region
      $region13: #{pixel_shuffle_upsample.3} parent=11 // pred_check
        %p112 = pneg %p69
      $region14: #{pixel_shuffle_upsample.3} parent=11 // pred_check_branch
        %114 = sbr.rel (%p112) target = $region16
      $region15: #{pixel_shuffle_upsample.3} parent=11 // pred_region
        _
      $region16: #{pixel_shuffle_upsample.3} parent=11 // pred_fallthru
        _
    $region12: #{pixel_shuffle_upsample.3} parent=5 // pred_fallthru
      _
    %p115 = scmp.lt.s32.totalorder %s8, 2
    // Predicated region
    $region17: #{pixel_shuffle_upsample.3} parent=5 // pred_check
      %p116 = pneg %p115
    $region18: #{pixel_shuffle_upsample.3} parent=5 // pred_check_branch
      %118 = sbr.rel (%p116) target = $region20
    $region19: #{pixel_shuffle_upsample.3} parent=5 // pred_region
      // Predicated region
      $region21: #{pixel_shuffle_upsample.3} parent=19 // pred_check
        %p119 = pneg %p42
      $region22: #{pixel_shuffle_upsample.3} parent=19 // pred_check_branch
        %121 = sbr.rel (%p119) target = $region24
      $region23: #{pixel_shuffle_upsample.3} parent=19 // pred_region
        %s122 = smul.u32 4, %s16
        %p123 = scmp.lt.s32.totalorder %s15, 1
        %s124 = scalar_select %p123, %s15, 1
        %p125 = scmp.lt.s32.totalorder %s122, 3
        %s126 = scalar_select %p125, %s122, 3
        %s127 = smul.addr %s126, 8
        %s128 = smul.addr %s124, 32
        %s129 = sadd.s32 %s127, %s128
        %s130 = smul.addr %s129, 8
        %s131 = scalar_lea.vmem %s0, %s130
        %s132 = smul.u32 4, %s16
      $region24: #{pixel_shuffle_upsample.3} parent=19 // pred_fallthru
        _
    $region20: #{pixel_shuffle_upsample.3} parent=5 // pred_fallthru
      _
    %p133 = scmp.le.s32.totalorder 1, %s8
    %p134 = scmp.lt.s32.totalorder %s8, 3
    %p135 = pnand %p133, %p134
    %p136 = pneg %p135
    // Predicated region
    $region25: #{pixel_shuffle_upsample.3} parent=5 // pred_check
      _
    $region26: #{pixel_shuffle_upsample.3} parent=5 // pred_check_branch
      %138 = sbr.rel (%p135) target = $region28
    $region27: #{pixel_shuffle_upsample.3} parent=5 // pred_region
      %s139 = ssub.s32 %s8, 1
      %s140 = smul.u32 4, %s18
      %p141 = scmp.lt.s32.totalorder %s17, 1
      %s142 = scalar_select %p141, %s17, 1
      %p143 = scmp.lt.s32.totalorder %s140, 3
      %s144 = scalar_select %p143, %s140, 3
      %s145 = smul.addr %s144, 8
      %s146 = smul.addr %s142, 32
      %s147 = sadd.s32 %s145, %s146
      %s148 = smul.addr %s147, 8
      %s149 = scalar_lea.vmem %s0, %s148
      %p150 = pneg %p48
      %p151 = pneg %p45
      %p152 = pneg %p69
      %p153 = pneg %p66
      %p154 = pneg %p97
      %p155 = pneg %p94
      %s156 = smul.u32 4, %s18
      %p157 = scmp.lt.s32.totalorder %s17, 1
      %s158 = scalar_select %p157, %s17, 1
      %p159 = scmp.lt.s32.totalorder %s156, 3
      %s160 = scalar_select %p159, %s156, 3
      %s161 = smul.addr %s160, 2
      %s162 = smul.addr %s158, 8
      %s163 = sadd.s32 %s161, %s162
      %s164 = smul.addr %s163, 8
      %s165 = scalar_lea.vmem %s2, %s164
      %s166 = smul.u32 4, %s18
      %p167 = scmp.lt.s32.totalorder %s17, 1
      %s168 = scalar_select %p167, %s17, 1
      %p169 = scmp.lt.s32.totalorder %s166, 3
      %s170 = scalar_select %p169, %s166, 3
      %s171 = smul.addr %s170, 8
      %s172 = smul.addr %s168, 32
      %s173 = sadd.s32 %s171, %s172
      %s174 = smul.addr %s173, 8
      %s175 = scalar_lea.vmem %s0, %s174
      %s176 = smul.u32 4, %s18
      %s177 = smul.u32 4, %s18
      %p178 = scmp.lt.s32.totalorder %s17, 1
      %s179 = scalar_select %p178, %s17, 1
      %p180 = scmp.lt.s32.totalorder %s177, 3
      %s181 = scalar_select %p180, %s177, 3
      %s182 = smul.addr %s181, 2
      %s183 = smul.addr %s179, 8
      %s184 = sadd.s32 %s182, %s183
      %s185 = smul.addr %s184, 8
      %s186 = scalar_lea.vmem %s2, %s185
      %s187 = smul.u32 4, %s18
      %v188 = vld [vmem:[%s175] sm:$0xff]
      %v189 = vld [vmem:[%s175 + $0x8] sm:$0xff]
      %v190 = vld [vmem:[%s175 + $0x10] sm:$0xff]
      %v191 = vld [vmem:[%s175 + $0x18] sm:$0xff]
      %v192 = vld [vmem:[%s175 + $0x20] sm:$0xff]
      %v193 = vld [vmem:[%s175 + $0x28] sm:$0xff]
      %v194 = vld [vmem:[%s175 + $0x30] sm:$0xff]
      %v195 = vld [vmem:[%s175 + $0x38] sm:$0xff]
      %v196 = vld [vmem:[%s175 + $0x40] sm:$0xff]
      %v197 = vld [vmem:[%s175 + $0x48] sm:$0xff]
      %v198 = vld [vmem:[%s175 + $0x50] sm:$0xff]
      %v199 = vld [vmem:[%s175 + $0x58] sm:$0xff]
      %v200 = vld [vmem:[%s175 + $0x60] sm:$0xff]
      %v201 = vld [vmem:[%s175 + $0x68] sm:$0xff]
      %v202 = vld [vmem:[%s175 + $0x70] sm:$0xff]
      %v203 = vld [vmem:[%s175 + $0x78] sm:$0xff]
      %v204 = vld [vmem:[%s175 + $0x80] sm:$0xff]
      %v205 = vld [vmem:[%s175 + $0x88] sm:$0xff]
      %v206 = vld [vmem:[%s175 + $0x90] sm:$0xff]
      %v207 = vld [vmem:[%s175 + $0x98] sm:$0xff]
      %v208 = vld [vmem:[%s175 + $0xa0] sm:$0xff]
      %v209 = vld [vmem:[%s175 + $0xa8] sm:$0xff]
      %v210 = vld [vmem:[%s175 + $0xb0] sm:$0xff]
      %v211 = vld [vmem:[%s175 + $0xb8] sm:$0xff]
      %v212 = vld [vmem:[%s175 + $0xc0] sm:$0xff]
      %v213 = vld [vmem:[%s175 + $0xc8] sm:$0xff]
      %v214 = vld [vmem:[%s175 + $0xd0] sm:$0xff]
      %v215 = vld [vmem:[%s175 + $0xd8] sm:$0xff]
      %v216 = vld [vmem:[%s175 + $0xe0] sm:$0xff]
      %v217 = vld [vmem:[%s175 + $0xe8] sm:$0xff]
      %v218 = vld [vmem:[%s175 + $0xf0] sm:$0xff]
      %v219 = vld [vmem:[%s175 + $0xf8] sm:$0xff]
      %vm228 = vcmask 1040384
      %v229 = vrot.slane %v192, 7
      %v230 = vrot.slane %v193, 7
      %v231 = vsel %vm228, %v229, %v230
      %v232 = vrot.slane %v200, 7
      %v233 = vrot.slane %v201, 7
      %v234 = vsel %vm228, %v232, %v233
      %v235 = vrot.slane %v208, 7
      %v236 = vrot.slane %v209, 7
      %v237 = vsel %vm228, %v235, %v236
      %v238 = vrot.slane %v216, 7
      %v239 = vrot.slane %v217, 7
      %v240 = vsel %vm228, %v238, %v239
      %v249 = vsel %vm228, %v192, %v229
      %v250 = vsel %vm228, %v200, %v232
      %v251 = vsel %vm228, %v208, %v235
      %v252 = vsel %vm228, %v216, %v238
      %v253 = vmul.f32 %v188, 2.0
      %v254 = vmul.f32 %v189, 2.0
      %v255 = vmul.f32 %v196, 2.0
      %v256 = vmul.f32 %v197, 2.0
      %v257 = vmul.f32 %v204, 2.0
      %v258 = vmul.f32 %v205, 2.0
      %v259 = vmul.f32 %v212, 2.0
      %v260 = vmul.f32 %v213, 2.0
      %v261 = vadd.f32 %v249, %v253
      %v262 = vadd.f32 %v231, %v254
      %v263 = vadd.f32 %v250, %v255
      %v264 = vadd.f32 %v234, %v256
      %v265 = vadd.f32 %v251, %v257
      %v266 = vadd.f32 %v237, %v258
      %v267 = vadd.f32 %v252, %v259
      %v268 = vadd.f32 %v240, %v260
      %v269 = vadd.f32 %v261, %v192
      %v270 = vadd.f32 %v262, %v193
      %v271 = vadd.f32 %v263, %v200
      %v272 = vadd.f32 %v264, %v201
      %v273 = vadd.f32 %v265, %v208
      %v274 = vadd.f32 %v266, %v209
      %v275 = vadd.f32 %v267, %v216
      %v276 = vadd.f32 %v268, %v217
      %v277 = vmul.f32 %v269, 0.25
      %v278 = vmul.f32 %v270, 0.25
      %v279 = vmul.f32 %v271, 0.25
      %v280 = vmul.f32 %v272, 0.25
      %v281 = vmul.f32 %v273, 0.25
      %v282 = vmul.f32 %v274, 0.25
      %v283 = vmul.f32 %v275, 0.25
      %v284 = vmul.f32 %v276, 0.25
      %v293 = vrot.slane %v194, 7
      %v294 = vrot.slane %v195, 7
      %v295 = vsel %vm228, %v293, %v294
      %v296 = vrot.slane %v202, 7
      %v297 = vrot.slane %v203, 7
      %v298 = vsel %vm228, %v296, %v297
      %v299 = vrot.slane %v210, 7
      %v300 = vrot.slane %v211, 7
      %v301 = vsel %vm228, %v299, %v300
      %v302 = vrot.slane %v218, 7
      %v303 = vrot.slane %v219, 7
      %v304 = vsel %vm228, %v302, %v303
      %v313 = vsel %vm228, %v194, %v293
      %v314 = vsel %vm228, %v202, %v296
      %v315 = vsel %vm228, %v210, %v299
      %v316 = vsel %vm228, %v218, %v302
      %v317 = vmul.f32 %v190, 2.0
      %v318 = vmul.f32 %v191, 2.0
      %v319 = vmul.f32 %v198, 2.0
      %v320 = vmul.f32 %v199, 2.0
      %v321 = vmul.f32 %v206, 2.0
      %v322 = vmul.f32 %v207, 2.0
      %v323 = vmul.f32 %v214, 2.0
      %v324 = vmul.f32 %v215, 2.0
      %v325 = vadd.f32 %v313, %v317
      %v326 = vadd.f32 %v295, %v318
      %v327 = vadd.f32 %v314, %v319
      %v328 = vadd.f32 %v298, %v320
      %v329 = vadd.f32 %v315, %v321
      %v330 = vadd.f32 %v301, %v322
      %v331 = vadd.f32 %v316, %v323
      %v332 = vadd.f32 %v304, %v324
      %v333 = vadd.f32 %v325, %v194
      %v334 = vadd.f32 %v326, %v195
      %v335 = vadd.f32 %v327, %v202
      %v336 = vadd.f32 %v328, %v203
      %v337 = vadd.f32 %v329, %v210
      %v338 = vadd.f32 %v330, %v211
      %v339 = vadd.f32 %v331, %v218
      %v340 = vadd.f32 %v332, %v219
      %v341 = vmul.f32 %v333, 0.25
      %v342 = vmul.f32 %v334, 0.25
      %v343 = vmul.f32 %v335, 0.25
      %v344 = vmul.f32 %v336, 0.25
      %v345 = vmul.f32 %v337, 0.25
      %v346 = vmul.f32 %v338, 0.25
      %v347 = vmul.f32 %v339, 0.25
      %v348 = vmul.f32 %v340, 0.25
      %v349 = vmul.f32 %v192, 2.0
      %v350 = vmul.f32 %v193, 2.0
      %v351 = vmul.f32 %v200, 2.0
      %v352 = vmul.f32 %v201, 2.0
      %v353 = vmul.f32 %v208, 2.0
      %v354 = vmul.f32 %v209, 2.0
      %v355 = vmul.f32 %v216, 2.0
      %v356 = vmul.f32 %v217, 2.0
      %v357 = vadd.f32 %v188, %v349
      %v358 = vadd.f32 %v189, %v350
      %v359 = vadd.f32 %v196, %v351
      %v360 = vadd.f32 %v197, %v352
      %v361 = vadd.f32 %v204, %v353
      %v362 = vadd.f32 %v205, %v354
      %v363 = vadd.f32 %v212, %v355
      %v364 = vadd.f32 %v213, %v356
      %vm373 = vcmask 1046528
      %v374 = vrot.slane %v188, 1
      %v375 = vrot.slane %v189, 1
      %v376 = vsel %vm373, %v374, %v375
      %v377 = vrot.slane %v196, 1
      %v378 = vrot.slane %v197, 1
      %v379 = vsel %vm373, %v377, %v378
      %v380 = vrot.slane %v204, 1
      %v381 = vrot.slane %v205, 1
      %v382 = vsel %vm373, %v380, %v381
      %v383 = vrot.slane %v212, 1
      %v384 = vrot.slane %v213, 1
      %v385 = vsel %vm373, %v383, %v384
      %v394 = vsel %vm373, %v375, %v189
      %v395 = vsel %vm373, %v378, %v197
      %v396 = vsel %vm373, %v381, %v205
      %v397 = vsel %vm373, %v384, %v213
      %v398 = vadd.f32 %v357, %v376
      %v399 = vadd.f32 %v358, %v394
      %v400 = vadd.f32 %v359, %v379
      %v401 = vadd.f32 %v360, %v395
      %v402 = vadd.f32 %v361, %v382
      %v403 = vadd.f32 %v362, %v396
      %v404 = vadd.f32 %v363, %v385
      %v405 = vadd.f32 %v364, %v397
      %v406 = vmul.f32 %v398, 0.25
      %v407 = vmul.f32 %v399, 0.25
      %v408 = vmul.f32 %v400, 0.25
      %v409 = vmul.f32 %v401, 0.25
      %v410 = vmul.f32 %v402, 0.25
      %v411 = vmul.f32 %v403, 0.25
      %v412 = vmul.f32 %v404, 0.25
      %v413 = vmul.f32 %v405, 0.25
      %v414 = vmul.f32 %v194, 2.0
      %v415 = vmul.f32 %v195, 2.0
      %v416 = vmul.f32 %v202, 2.0
      %v417 = vmul.f32 %v203, 2.0
      %v418 = vmul.f32 %v210, 2.0
      %v419 = vmul.f32 %v211, 2.0
      %v420 = vmul.f32 %v218, 2.0
      %v421 = vmul.f32 %v219, 2.0
      %v422 = vadd.f32 %v190, %v414
      %v423 = vadd.f32 %v191, %v415
      %v424 = vadd.f32 %v198, %v416
      %v425 = vadd.f32 %v199, %v417
      %v426 = vadd.f32 %v206, %v418
      %v427 = vadd.f32 %v207, %v419
      %v428 = vadd.f32 %v214, %v420
      %v429 = vadd.f32 %v215, %v421
      %v438 = vrot.slane %v190, 1
      %v439 = vrot.slane %v191, 1
      %v440 = vsel %vm373, %v438, %v439
      %v441 = vrot.slane %v198, 1
      %v442 = vrot.slane %v199, 1
      %v443 = vsel %vm373, %v441, %v442
      %v444 = vrot.slane %v206, 1
      %v445 = vrot.slane %v207, 1
      %v446 = vsel %vm373, %v444, %v445
      %v447 = vrot.slane %v214, 1
      %v448 = vrot.slane %v215, 1
      %v449 = vsel %vm373, %v447, %v448
      %v458 = vsel %vm373, %v439, %v191
      %v459 = vsel %vm373, %v442, %v199
      %v460 = vsel %vm373, %v445, %v207
      %v461 = vsel %vm373, %v448, %v215
      %v462 = vadd.f32 %v422, %v440
      %v463 = vadd.f32 %v423, %v458
      %v464 = vadd.f32 %v424, %v443
      %v465 = vadd.f32 %v425, %v459
      %v466 = vadd.f32 %v426, %v446
      %v467 = vadd.f32 %v427, %v460
      %v468 = vadd.f32 %v428, %v449
      %v469 = vadd.f32 %v429, %v461
      %v470 = vmul.f32 %v462, 0.25
      %v471 = vmul.f32 %v463, 0.25
      %v472 = vmul.f32 %v464, 0.25
      %v473 = vmul.f32 %v465, 0.25
      %v474 = vmul.f32 %v466, 0.25
      %v475 = vmul.f32 %v467, 0.25
      %v476 = vmul.f32 %v468, 0.25
      %v477 = vmul.f32 %v469, 0.25
      %486 = vrot.lane.b32.xlu0 %v341, 1
      %v487 = vpop.permute.xlu0 %486
      %488 = vrot.lane.b32.xlu0 %v342, 1
      %v489 = vpop.permute.xlu0 %488
      %490 = vrot.lane.b32.xlu0 %v343, 1
      %v491 = vpop.permute.xlu0 %490
      %492 = vrot.lane.b32.xlu0 %v344, 1
      %v493 = vpop.permute.xlu0 %492
      %494 = vrot.lane.b32.xlu0 %v345, 1
      %v495 = vpop.permute.xlu0 %494
      %496 = vrot.lane.b32.xlu0 %v346, 1
      %v497 = vpop.permute.xlu0 %496
      %498 = vrot.lane.b32.xlu0 %v347, 1
      %v499 = vpop.permute.xlu0 %498
      %500 = vrot.lane.b32.xlu0 %v348, 1
      %v501 = vpop.permute.xlu0 %500
      %vm510 = vcmask 7168
      %v511 = vsel %vm510, %v341, %v487
      %v512 = vsel %vm510, %v342, %v489
      %v513 = vsel %vm510, %v343, %v491
      %v514 = vsel %vm510, %v344, %v493
      %v515 = vsel %vm510, %v345, %v495
      %v516 = vsel %vm510, %v346, %v497
      %v517 = vsel %vm510, %v347, %v499
      %v518 = vsel %vm510, %v348, %v501
      %v519 = vmul.f32 %v277, 2.0
      %v520 = vmul.f32 %v278, 2.0
      %v521 = vmul.f32 %v279, 2.0
      %v522 = vmul.f32 %v280, 2.0
      %v523 = vmul.f32 %v281, 2.0
      %v524 = vmul.f32 %v282, 2.0
      %v525 = vmul.f32 %v283, 2.0
      %v526 = vmul.f32 %v284, 2.0
      %v527 = vadd.f32 %v511, %v519
      %v528 = vadd.f32 %v512, %v520
      %v529 = vadd.f32 %v513, %v521
      %v530 = vadd.f32 %v514, %v522
      %v531 = vadd.f32 %v515, %v523
      %v532 = vadd.f32 %v516, %v524
      %v533 = vadd.f32 %v517, %v525
      %v534 = vadd.f32 %v518, %v526
      %v535 = vadd.f32 %v527, %v341
      %v536 = vadd.f32 %v528, %v342
      %v537 = vadd.f32 %v529, %v343
      %v538 = vadd.f32 %v530, %v344
      %v539 = vadd.f32 %v531, %v345
      %v540 = vadd.f32 %v532, %v346
      %v541 = vadd.f32 %v533, %v347
      %v542 = vadd.f32 %v534, %v348
      %v543 = vmul.f32 %v535, 0.25
      %v544 = vmul.f32 %v536, 0.25
      %v545 = vmul.f32 %v537, 0.25
      %v546 = vmul.f32 %v538, 0.25
      %v547 = vmul.f32 %v539, 0.25
      %v548 = vmul.f32 %v540, 0.25
      %v549 = vmul.f32 %v541, 0.25
      %v550 = vmul.f32 %v542, 0.25
      %v551 = vmul.f32 %v341, 2.0
      %v552 = vmul.f32 %v342, 2.0
      %v553 = vmul.f32 %v343, 2.0
      %v554 = vmul.f32 %v344, 2.0
      %v555 = vmul.f32 %v345, 2.0
      %v556 = vmul.f32 %v346, 2.0
      %v557 = vmul.f32 %v347, 2.0
      %v558 = vmul.f32 %v348, 2.0
      %v559 = vadd.f32 %v277, %v551
      %v560 = vadd.f32 %v278, %v552
      %v561 = vadd.f32 %v279, %v553
      %v562 = vadd.f32 %v280, %v554
      %v563 = vadd.f32 %v281, %v555
      %v564 = vadd.f32 %v282, %v556
      %v565 = vadd.f32 %v283, %v557
      %v566 = vadd.f32 %v284, %v558
      %575 = vrot.lane.b32.xlu0 %v277, 127
      %v576 = vpop.permute.xlu0 %575
      %577 = vrot.lane.b32.xlu0 %v278, 127
      %v578 = vpop.permute.xlu0 %577
      %579 = vrot.lane.b32.xlu0 %v279, 127
      %v580 = vpop.permute.xlu0 %579
      %581 = vrot.lane.b32.xlu0 %v280, 127
      %v582 = vpop.permute.xlu0 %581
      %583 = vrot.lane.b32.xlu0 %v281, 127
      %v584 = vpop.permute.xlu0 %583
      %585 = vrot.lane.b32.xlu0 %v282, 127
      %v586 = vpop.permute.xlu0 %585
      %587 = vrot.lane.b32.xlu0 %v283, 127
      %v588 = vpop.permute.xlu0 %587
      %589 = vrot.lane.b32.xlu0 %v284, 127
      %v590 = vpop.permute.xlu0 %589
      %vm599 = vcmask 121856
      %v600 = vsel %vm599, %v576, %v277
      %v601 = vsel %vm599, %v578, %v278
      %v602 = vsel %vm599, %v580, %v279
      %v603 = vsel %vm599, %v582, %v280
      %v604 = vsel %vm599, %v584, %v281
      %v605 = vsel %vm599, %v586, %v282
      %v606 = vsel %vm599, %v588, %v283
      %v607 = vsel %vm599, %v590, %v284
      %v608 = vadd.f32 %v559, %v600
      %v609 = vadd.f32 %v560, %v601
      %v610 = vadd.f32 %v561, %v602
      %v611 = vadd.f32 %v562, %v603
      %v612 = vadd.f32 %v563, %v604
      %v613 = vadd.f32 %v564, %v605
      %v614 = vadd.f32 %v565, %v606
      %v615 = vadd.f32 %v566, %v607
      %v616 = vmul.f32 %v608, 0.25
      %v617 = vmul.f32 %v609, 0.25
      %v618 = vmul.f32 %v610, 0.25
      %v619 = vmul.f32 %v611, 0.25
      %v620 = vmul.f32 %v612, 0.25
      %v621 = vmul.f32 %v613, 0.25
      %v622 = vmul.f32 %v614, 0.25
      %v623 = vmul.f32 %v615, 0.25
      %632 = vrot.lane.b32.xlu0 %v470, 1
      %v633 = vpop.permute.xlu0 %632
      %634 = vrot.lane.b32.xlu0 %v471, 1
      %v635 = vpop.permute.xlu0 %634
      %636 = vrot.lane.b32.xlu0 %v472, 1
      %v637 = vpop.permute.xlu0 %636
      %638 = vrot.lane.b32.xlu0 %v473, 1
      %v639 = vpop.permute.xlu0 %638
      %640 = vrot.lane.b32.xlu0 %v474, 1
      %v641 = vpop.permute.xlu0 %640
      %642 = vrot.lane.b32.xlu0 %v475, 1
      %v643 = vpop.permute.xlu0 %642
      %644 = vrot.lane.b32.xlu0 %v476, 1
      %v645 = vpop.permute.xlu0 %644
      %646 = vrot.lane.b32.xlu0 %v477, 1
      %v647 = vpop.permute.xlu0 %646
      %v656 = vsel %vm510, %v470, %v633
      %v657 = vsel %vm510, %v471, %v635
      %v658 = vsel %vm510, %v472, %v637
      %v659 = vsel %vm510, %v473, %v639
      %v660 = vsel %vm510, %v474, %v641
      %v661 = vsel %vm510, %v475, %v643
      %v662 = vsel %vm510, %v476, %v645
      %v663 = vsel %vm510, %v477, %v647
      %v664 = vmul.f32 %v406, 2.0
      %v665 = vmul.f32 %v407, 2.0
      %v666 = vmul.f32 %v408, 2.0
      %v667 = vmul.f32 %v409, 2.0
      %v668 = vmul.f32 %v410, 2.0
      %v669 = vmul.f32 %v411, 2.0
      %v670 = vmul.f32 %v412, 2.0
      %v671 = vmul.f32 %v413, 2.0
      %v672 = vadd.f32 %v656, %v664
      %v673 = vadd.f32 %v657, %v665
      %v674 = vadd.f32 %v658, %v666
      %v675 = vadd.f32 %v659, %v667
      %v676 = vadd.f32 %v660, %v668
      %v677 = vadd.f32 %v661, %v669
      %v678 = vadd.f32 %v662, %v670
      %v679 = vadd.f32 %v663, %v671
      %v680 = vadd.f32 %v672, %v470
      %v681 = vadd.f32 %v673, %v471
      %v682 = vadd.f32 %v674, %v472
      %v683 = vadd.f32 %v675, %v473
      %v684 = vadd.f32 %v676, %v474
      %v685 = vadd.f32 %v677, %v475
      %v686 = vadd.f32 %v678, %v476
      %v687 = vadd.f32 %v679, %v477
      %v688 = vmul.f32 %v680, 0.25
      %v689 = vmul.f32 %v681, 0.25
      %v690 = vmul.f32 %v682, 0.25
      %v691 = vmul.f32 %v683, 0.25
      %v692 = vmul.f32 %v684, 0.25
      %v693 = vmul.f32 %v685, 0.25
      %v694 = vmul.f32 %v686, 0.25
      %v695 = vmul.f32 %v687, 0.25
      %v696 = vmul.f32 %v470, 2.0
      %v697 = vmul.f32 %v471, 2.0
      %v698 = vmul.f32 %v472, 2.0
      %v699 = vmul.f32 %v473, 2.0
      %v700 = vmul.f32 %v474, 2.0
      %v701 = vmul.f32 %v475, 2.0
      %v702 = vmul.f32 %v476, 2.0
      %v703 = vmul.f32 %v477, 2.0
      %v704 = vadd.f32 %v406, %v696
      %v705 = vadd.f32 %v407, %v697
      %v706 = vadd.f32 %v408, %v698
      %v707 = vadd.f32 %v409, %v699
      %v708 = vadd.f32 %v410, %v700
      %v709 = vadd.f32 %v411, %v701
      %v710 = vadd.f32 %v412, %v702
      %v711 = vadd.f32 %v413, %v703
      %720 = vrot.lane.b32.xlu0 %v406, 127
      %v721 = vpop.permute.xlu0 %720
      %722 = vrot.lane.b32.xlu0 %v407, 127
      %v723 = vpop.permute.xlu0 %722
      %724 = vrot.lane.b32.xlu0 %v408, 127
      %v725 = vpop.permute.xlu0 %724
      %726 = vrot.lane.b32.xlu0 %v409, 127
      %v727 = vpop.permute.xlu0 %726
      %728 = vrot.lane.b32.xlu0 %v410, 127
      %v729 = vpop.permute.xlu0 %728
      %730 = vrot.lane.b32.xlu0 %v411, 127
      %v731 = vpop.permute.xlu0 %730
      %732 = vrot.lane.b32.xlu0 %v412, 127
      %v733 = vpop.permute.xlu0 %732
      %734 = vrot.lane.b32.xlu0 %v413, 127
      %v735 = vpop.permute.xlu0 %734
      %v744 = vsel %vm599, %v721, %v406
      %v745 = vsel %vm599, %v723, %v407
      %v746 = vsel %vm599, %v725, %v408
      %v747 = vsel %vm599, %v727, %v409
      %v748 = vsel %vm599, %v729, %v410
      %v749 = vsel %vm599, %v731, %v411
      %v750 = vsel %vm599, %v733, %v412
      %v751 = vsel %vm599, %v735, %v413
      %v752 = vadd.f32 %v704, %v744
      %v753 = vadd.f32 %v705, %v745
      %v754 = vadd.f32 %v706, %v746
      %v755 = vadd.f32 %v707, %v747
      %v756 = vadd.f32 %v708, %v748
      %v757 = vadd.f32 %v709, %v749
      %v758 = vadd.f32 %v710, %v750
      %v759 = vadd.f32 %v711, %v751
      %v760 = vmul.f32 %v752, 0.25
      %v761 = vmul.f32 %v753, 0.25
      %v762 = vmul.f32 %v754, 0.25
      %v763 = vmul.f32 %v755, 0.25
      %v764 = vmul.f32 %v756, 0.25
      %v765 = vmul.f32 %v757, 0.25
      %v766 = vmul.f32 %v758, 0.25
      %v767 = vmul.f32 %v759, 0.25
      %776 = vrot.lane.b32.xlu0 %v616, 16
      %v777 = vpop.permute.xlu0 %776
      %778 = vrot.lane.b32.xlu0 %v617, 16
      %v779 = vpop.permute.xlu0 %778
      %780 = vrot.lane.b32.xlu0 %v618, 16
      %v781 = vpop.permute.xlu0 %780
      %782 = vrot.lane.b32.xlu0 %v619, 16
      %v783 = vpop.permute.xlu0 %782
      %784 = vrot.lane.b32.xlu0 %v620, 16
      %v785 = vpop.permute.xlu0 %784
      %786 = vrot.lane.b32.xlu0 %v621, 16
      %v787 = vpop.permute.xlu0 %786
      %788 = vrot.lane.b32.xlu0 %v622, 16
      %v789 = vpop.permute.xlu0 %788
      %790 = vrot.lane.b32.xlu0 %v623, 16
      %v791 = vpop.permute.xlu0 %790
      %808 = vrot.lane.b32.xlu0 %v688, 32
      %v809 = vpop.permute.xlu0 %808
      %810 = vrot.lane.b32.xlu0 %v689, 32
      %v811 = vpop.permute.xlu0 %810
      %812 = vrot.lane.b32.xlu0 %v690, 32
      %v813 = vpop.permute.xlu0 %812
      %814 = vrot.lane.b32.xlu0 %v691, 32
      %v815 = vpop.permute.xlu0 %814
      %816 = vrot.lane.b32.xlu0 %v692, 32
      %v817 = vpop.permute.xlu0 %816
      %818 = vrot.lane.b32.xlu0 %v693, 32
      %v819 = vpop.permute.xlu0 %818
      %820 = vrot.lane.b32.xlu0 %v694, 32
      %v821 = vpop.permute.xlu0 %820
      %822 = vrot.lane.b32.xlu0 %v695, 32
      %v823 = vpop.permute.xlu0 %822
      %840 = vrot.lane.b32.xlu0 %v760, 48
      %v841 = vpop.permute.xlu0 %840
      %842 = vrot.lane.b32.xlu0 %v761, 48
      %v843 = vpop.permute.xlu0 %842
      %844 = vrot.lane.b32.xlu0 %v762, 48
      %v845 = vpop.permute.xlu0 %844
      %846 = vrot.lane.b32.xlu0 %v763, 48
      %v847 = vpop.permute.xlu0 %846
      %848 = vrot.lane.b32.xlu0 %v764, 48
      %v849 = vpop.permute.xlu0 %848
      %850 = vrot.lane.b32.xlu0 %v765, 48
      %v851 = vpop.permute.xlu0 %850
      %852 = vrot.lane.b32.xlu0 %v766, 48
      %v853 = vpop.permute.xlu0 %852
      %854 = vrot.lane.b32.xlu0 %v767, 48
      %v855 = vpop.permute.xlu0 %854
      %vm864 = vcmask 130048
      %v865 = vsel %vm864, %v543, %v777
      %v866 = vsel %vm864, %v544, %v779
      %v867 = vsel %vm864, %v545, %v781
      %v868 = vsel %vm864, %v546, %v783
      %v869 = vsel %vm864, %v547, %v785
      %v870 = vsel %vm864, %v548, %v787
      %v871 = vsel %vm864, %v549, %v789
      %v872 = vsel %vm864, %v550, %v791
      %vm873 = vcmask 261120
      %v874 = vsel %vm873, %v865, %v809
      %v875 = vsel %vm873, %v866, %v811
      %v876 = vsel %vm873, %v867, %v813
      %v877 = vsel %vm873, %v868, %v815
      %v878 = vsel %vm873, %v869, %v817
      %v879 = vsel %vm873, %v870, %v819
      %v880 = vsel %vm873, %v871, %v821
      %v881 = vsel %vm873, %v872, %v823
      %vm882 = vcmask 392192
      %v883 = vsel %vm882, %v874, %v841
      %v884 = vsel %vm882, %v875, %v843
      %v885 = vsel %vm882, %v876, %v845
      %v886 = vsel %vm882, %v877, %v847
      %v887 = vsel %vm882, %v878, %v849
      %v888 = vsel %vm882, %v879, %v851
      %v889 = vsel %vm882, %v880, %v853
      %v890 = vsel %vm882, %v881, %v855
      %v891 = vld [vmem:[%s1] sm:$0xff]
      %v892 = vld [vmem:[%s1 + $0x8] sm:$0xff]
      %v893 = vld [vmem:[%s1 + $0x10] sm:$0xff]
      %v894 = vld [vmem:[%s1 + $0x18] sm:$0xff]
      %v895 = vld [vmem:[%s1 + $0x20] sm:$0xff]
      %v896 = vld [vmem:[%s1 + $0x28] sm:$0xff]
      %v897 = vld [vmem:[%s1 + $0x30] sm:$0xff]
      %v898 = vld [vmem:[%s1 + $0x38] sm:$0xff]
      %vm899 = vcmask 523264
      %v901 = vsel %vm899, %v883, 0
      %v904 = vsel %vm899, %v884, 0
      %v907 = vsel %vm899, %v885, 0
      %v910 = vsel %vm899, %v886, 0
      %v913 = vsel %vm899, %v887, 0
      %v916 = vsel %vm899, %v888, 0
      %v919 = vsel %vm899, %v889, 0
      %v922 = vsel %vm899, %v890, 0
      %924 = vmatpush.msra.mxu0 0.0
      %925 = vmatpush.msra.mxu0 0.0
      %926 = vmatpush.msra.mxu0 0.0
      %927 = vmatpush.msra.mxu0 0.0
      %928 = vmatpush.msra.mxu0 0.0
      %929 = vmatpush.msra.mxu0 0.0
      %930 = vmatpush.msra.mxu0 0.0
      %931 = vmatpush.msra.mxu0 0.0
      %932 = vmatpush.msra.mxu0 %v898
      %933 = vmatpush.msra.mxu0 %v897
      %934 = vmatpush.msra.mxu0 %v896
      %935 = vmatpush.msra.mxu0 %v895
      %936 = vmatpush.msra.mxu0 %v894
      %937 = vmatpush.msra.mxu0 %v893
      %938 = vmatpush.msra.mxu0 %v892
      %939 = vmatpush.msra.mxu0 %v891
      %940 = vmatmul.f32.gmra.mxu0 %v901
      %v941 = vpop.f32.mrf.mxu0
      %v942 = vadd.f32 0.0, %v941
      %943 = vmatmul.f32.gmra.mxu0 %v904
      %v944 = vpop.f32.mrf.mxu0
      %v945 = vadd.f32 0.0, %v944
      %946 = vmatmul.f32.gmra.mxu0 %v907
      %v947 = vpop.f32.mrf.mxu0
      %v948 = vadd.f32 0.0, %v947
      %949 = vmatmul.f32.gmra.mxu0 %v910
      %v950 = vpop.f32.mrf.mxu0
      %v951 = vadd.f32 0.0, %v950
      %952 = vmatmul.f32.gmra.mxu0 %v913
      %v953 = vpop.f32.mrf.mxu0
      %v954 = vadd.f32 0.0, %v953
      %955 = vmatmul.f32.gmra.mxu0 %v916
      %v956 = vpop.f32.mrf.mxu0
      %v957 = vadd.f32 0.0, %v956
      %958 = vmatmul.f32.gmra.mxu0 %v919
      %v959 = vpop.f32.mrf.mxu0
      %v960 = vadd.f32 0.0, %v959
      %961 = vmatmul.f32.gmra.mxu0 %v922
      %v962 = vpop.f32.mrf.mxu0
      %v963 = vadd.f32 0.0, %v962
      %964 = vdwg.mxu0
      %965 = vst.msk [vmem:[%s186] sm:$0xff] %vm899, %v942
      %966 = vst.msk [vmem:[%s186 + $0x8] sm:$0xff] %vm899, %v945
      %967 = vst.msk [vmem:[%s186 + $0x10] sm:$0xff] %vm899, %v948
      %968 = vst.msk [vmem:[%s186 + $0x18] sm:$0xff] %vm899, %v951
      %969 = vst.msk [vmem:[%s186 + $0x20] sm:$0xff] %vm899, %v954
      %970 = vst.msk [vmem:[%s186 + $0x28] sm:$0xff] %vm899, %v957
      %971 = vst.msk [vmem:[%s186 + $0x30] sm:$0xff] %vm899, %v960
      %972 = vst.msk [vmem:[%s186 + $0x38] sm:$0xff] %vm899, %v963
      %s973 = smul.u32 4, %s18
      %p974 = scmp.lt.s32.totalorder %s17, 1
      %s975 = scalar_select %p974, %s17, 1
      %p976 = scmp.lt.s32.totalorder %s973, 3
      %s977 = scalar_select %p976, %s973, 3
      %s978 = smul.addr %s977, 2
      %s979 = smul.addr %s975, 8
      %s980 = sadd.s32 %s978, %s979
      %s981 = smul.addr %s980, 8
      %s982 = scalar_lea.vmem %s2, %s981
      // Predicated region
      $region29: #{pixel_shuffle_upsample.3} parent=27 // pred_check
        %p983 = pneg %p94
      $region30: #{pixel_shuffle_upsample.3} parent=27 // pred_check_branch
        %985 = sbr.rel (%p983) target = $region32
      $region31: #{pixel_shuffle_upsample.3} parent=27 // pred_region
        %s986 = smul.u32 4, %s18
      $region32: #{pixel_shuffle_upsample.3} parent=27 // pred_fallthru
        _
    $region28: #{pixel_shuffle_upsample.3} parent=5 // pred_fallthru
      _
    %p987 = scmp.le.s32.totalorder 2, %s8
    // Predicated region
    $region33: #{pixel_shuffle_upsample.3} parent=5 // pred_check
      %p988 = pneg %p987
    $region34: #{pixel_shuffle_upsample.3} parent=5 // pred_check_branch
      %990 = sbr.rel (%p988) target = $region36
    $region35: #{pixel_shuffle_upsample.3} parent=5 // pred_region
      %s991 = ssub.s32 %s8, 2
      // Predicated region
      $region37: #{pixel_shuffle_upsample.3} parent=35 // pred_check
        %p992 = pneg %p100
      $region38: #{pixel_shuffle_upsample.3} parent=35 // pred_check_branch
        %994 = sbr.rel (%p992) target = $region40
      $region39: #{pixel_shuffle_upsample.3} parent=35 // pred_region
        %s995 = smul.u32 4, %s20
        %p996 = scmp.lt.s32.totalorder %s19, 1
        %s997 = scalar_select %p996, %s19, 1
        %p998 = scmp.lt.s32.totalorder %s995, 3
        %s999 = scalar_select %p998, %s995, 3
        %s1000 = smul.addr %s999, 2
        %s1001 = smul.addr %s997, 8
        %s1002 = sadd.s32 %s1000, %s1001
        %s1003 = smul.addr %s1002, 8
        %s1004 = scalar_lea.vmem %s2, %s1003
      $region40: #{pixel_shuffle_upsample.3} parent=35 // pred_fallthru
        _
    $region36: #{pixel_shuffle_upsample.3} parent=5 // pred_fallthru
      _
  $region6: #{pixel_shuffle_upsample.3} parent=0 // loop_footer
    %s12 = sadd.s32 1, %s8
  $region7: #{pixel_shuffle_upsample.3} parent=0 // loop_footer_branch
    %7 = sbr.rel target = $region3
  $region8: #{pixel_shuffle_upsample.3} parent=0 // loop_exit
    _

</llo_original>
